<compile_context>
chip_gen: v7x
topology: tpu7x:2x2x1
jax: 0.10.0
libtpu: 0.0.40
codegen_flags: <defaults>
</compile_context>

<pallas_src>
import jax
import jax.numpy as jnp
from jax.experimental import pallas as pl
from jax.experimental.pallas import tpu as pltpu


def _gelu_tanh(x):
    # TODO(synk): build_act('gelu') definition unavailable; assumed nn.GELU().
    # Tanh approximation (EUP transcendental slot); deviation from exact
    # erf-GELU is ~3e-4 max, far below the test tolerance.
    c = 0.7978845608028654  # sqrt(2/pi)
    return 0.5 * x * (1.0 + jnp.tanh(c * (x + 0.044715 * x * x * x)))


def _attn2_kernel(x_ref,
                  w_qkv_ref, b_qkv_ref,
                  w_fuse_ref, b_fuse_ref,
                  m5_ref, b5_ref,
                  m7_ref, b7_ref,
                  w_pw_ref, b_pw_ref,
                  w_proj_ref, b_proj_ref,
                  o_ref):
    f32, bf16 = jnp.float32, jnp.bfloat16
    _, bb, H, WC = x_ref.shape
    M = bb * H                          # rows per input (x1 or x2) this step

    def mm(a_bf16, w_ref):              # bf16 MXU matmul, f32 accumulate
        return jax.lax.dot_general(a_bf16, w_ref[...],
                                   (((1,), (0,)), ((), ())),
                                   preferred_element_type=f32)

    # (2, bb, H, WC) bf16 -> (2M, WC): [x1 of all bb images ; x2 of all imgs]
    x = x_ref[...].reshape(2 * M, WC)

    # qkv 1x1 conv + GELU — one matmul over both stacked inputs.
    t = _gelu_tanh(mm(x, w_qkv_ref) + b_qkv_ref[...])           # (2M, WC) f32

    # TODO(synk): TFM_3D_11 definition not provided; approximated as a learned
    # 1x1 fusion of the (t1, t2) pair:  [t1 | t2] @ [Wf1 ; Wf2]   (K = 256).
    tt = jnp.concatenate([t[:M], t[M:]], axis=1).astype(bf16)   # (M, 2*WC)
    fusion = mm(tt, w_fuse_ref) + b_fuse_ref[...]               # (M, WC) f32

    # Depthwise convs: row shifts via sublane roll + (row mod H) boundary mask
    # (zero padding and per-image isolation for free); column shifts/taps are
    # folded into a single pre-stacked (K*WC, WC) matrix per conv.
    row = jax.lax.broadcasted_iota(jnp.int32, (M, WC), 0) % H

    def depthwise(v_f32, taps_ref, b_ref, K, dil):
        pad = dil * (K // 2)
        parts = []
        for ky in range(K):
            d = dil * ky - pad                       # row offset of this tap
            if d == 0:
                parts.append(v_f32)
            else:
                s = pltpu.roll(v_f32, (-d) % M, axis=0)          # XLU rotate
                valid = jnp.logical_and(row + d >= 0, row + d < H)
                parts.append(jnp.where(valid, s, 0.0))
        stacked = jnp.concatenate(parts, axis=1).astype(bf16)   # (M, K*WC)
        return mm(stacked, taps_ref) + b_ref[...]               # (M, WC) f32

    acc = depthwise(fusion, m5_ref, b5_ref, 5, 1)    # 5x5, pad 2
    acc2 = depthwise(acc, m7_ref, b7_ref, 7, 3)      # 7x7, dil 3, pad 9

    # pointwise 1x1 of the LKA, modulation, shared projection (one matmul).
    attn = mm(acc2.astype(bf16), w_pw_ref) + b_pw_ref[...]      # (M, WC)
    y = (jnp.concatenate([attn, attn], axis=0) * t).astype(bf16)  # (2M, WC)
    out = mm(y, w_proj_ref) + b_proj_ref[...]
    o_ref[...] = out.reshape(o_ref.shape).astype(o_ref.dtype)


def _prepare(params, H, W):
    """Fold all weights into the lane-dense (rows, W*C) matmul formulation."""
    C = params['w_qkv'].shape[0]
    WC = W * C
    f32, bf16 = jnp.float32, jnp.bfloat16
    eye_w = jnp.eye(W, dtype=f32)

    def blockdiag(w):                    # (C,C) 1x1-conv weight -> (WC,WC)
        return jnp.kron(eye_w, w.astype(f32)).astype(bf16)

    def lane(b):                         # (1,C) bias -> (1,WC), channel-fast
        return jnp.tile(b.reshape(1, C).astype(f32), (1, W))

    def dw_taps(wk, K, dil):
        # Depthwise KxK conv ('same', dilation dil): per row-tap ky a (WC,WC)
        # column shift+tap matrix (zero padding encoded by vanishing shifts);
        # all K taps stacked row-wise so the kernel contracts them with a
        # single (M, K*WC) @ (K*WC, WC) matmul.
        pad = dil * (K // 2)
        ms = []
        for ky in range(K):
            m = jnp.zeros((WC, WC), f32)
            for kx in range(K):
                shift = jnp.eye(W, k=pad - dil * kx, dtype=f32)  # column shift
                m = m + jnp.kron(shift, jnp.diag(wk[ky, kx].astype(f32)))
            ms.append(m)
        return jnp.concatenate(ms, axis=0).astype(bf16)          # (K*WC, WC)

    w_fuse = jnp.concatenate([blockdiag(params['w_fuse1']),
                              blockdiag(params['w_fuse2'])], axis=0)  # (2WC,WC)

    return (
        blockdiag(params['w_qkv']), lane(params['b_qkv']),
        w_fuse, lane(params['b_fuse']),
        dw_taps(params['w_dw5'], 5, 1), lane(params['b_dw5']),
        dw_taps(params['w_dw7'], 7, 3), lane(params['b_dw7']),
        blockdiag(params['w_pw']), lane(params['b_pw']),
        blockdiag(params['w_proj']), lane(params['b_proj']),
    )


def init_params(key, dim):
    ks = jax.random.split(key, 13)

    def w(k, shape, scale=0.1):
        return scale * jax.random.normal(k, shape, jnp.float32)

    return dict(
        w_qkv=w(ks[0], (dim, dim)),   b_qkv=w(ks[1], (1, dim)),
        w_fuse1=w(ks[2], (dim, dim)), w_fuse2=w(ks[3], (dim, dim)),
        b_fuse=w(ks[4], (1, dim)),
        w_dw5=w(ks[5], (5, 5, dim)),  b_dw5=w(ks[6], (1, dim)),
        w_dw7=w(ks[7], (7, 7, dim)),  b_dw7=w(ks[8], (1, dim)),
        w_pw=w(ks[9], (dim, dim)),    b_pw=w(ks[10], (1, dim)),
        w_proj=w(ks[11], (dim, dim)), b_proj=w(ks[12], (1, dim)),
    )


def attention_module2(x1_nchw, x2_nchw, params, *, mxu_rows=256):
    B, C, H, W = x1_nchw.shape
    WC = W * C
    assert WC % 128 == 0 and H % 8 == 0, \
        "lane-dense fold requires W*C % 128 == 0 and H % 8 == 0"

    # Batch-block: BB images per grid step so BB*2H ~= mxu_rows (256 fills the
    # v6e/v7x MXU M dimension; use mxu_rows=128 on v5e).  On v7x with small B,
    # cap BB at B//2 to keep >= 2 grid steps so both TensorCores get work.
    bb = max(1, min(B, mxu_rows // (2 * H)))
    while B % bb:
        bb -= 1
    grid = (B // bb,)

    def fold(x):  # NCHW -> lane-dense (B, H, W*C) bf16, channels fastest
        return jnp.transpose(x, (0, 2, 3, 1)).reshape(B, H, WC).astype(jnp.bfloat16)

    x = jnp.stack([fold(x1_nchw), fold(x2_nchw)], axis=0)        # (2,B,H,WC)
    weights = _prepare(params, H, W)

    def whole(a):  # constant-index whole-array spec (weights)
        return pl.BlockSpec(a.shape, lambda b, _nd=a.ndim: (0,) * _nd)

    io_spec = pl.BlockSpec((2, bb, H, WC), lambda b: (0, b, 0, 0))

    out = pl.pallas_call(
        _attn2_kernel,
        grid=grid,
        in_specs=[io_spec] + [whole(wt) for wt in weights],
        out_specs=io_spec,
        out_shape=jax.ShapeDtypeStruct((2, B, H, WC), jnp.float32),
        compiler_params=pltpu.CompilerParams(
            dimension_semantics=("parallel",)),
    )(x, *weights)

    def unfold(y):  # (B, H, W*C) -> NCHW
        return jnp.transpose(y.reshape(B, H, W, C), (0, 3, 1, 2))

    return unfold(out[0]), unfold(out[1])


def reference(x1_nchw, x2_nchw, p):
    # Pure-JAX (XLA) reference with exact erf-GELU for validation.
    x1 = jnp.transpose(x1_nchw, (0, 2, 3, 1)).astype(jnp.float32)
    x2 = jnp.transpose(x2_nchw, (0, 2, 3, 1)).astype(jnp.float32)
    C = x1.shape[-1]

    def gelu(v):
        return 0.5 * v * (1.0 + jax.lax.erf(v * 0.7071067811865476))

    def conv1x1(v, w, b):
        return jnp.einsum('bhwc,cd->bhwd', v, w) + b.reshape(1, 1, 1, -1)

    t1 = gelu(conv1x1(x1, p['w_qkv'], p['b_qkv']))
    t2 = gelu(conv1x1(x2, p['w_qkv'], p['b_qkv']))
    fusion = (jnp.einsum('bhwc,cd->bhwd', t1, p['w_fuse1'])
              + jnp.einsum('bhwc,cd->bhwd', t2, p['w_fuse2'])
              + p['b_fuse'].reshape(1, 1, 1, -1))
    dn = ('NHWC', 'HWIO', 'NHWC')
    dw5 = jax.lax.conv_general_dilated(
        fusion, p['w_dw5'].reshape(5, 5, 1, C), (1, 1), ((2, 2), (2, 2)),
        dimension_numbers=dn, feature_group_count=C
    ) + p['b_dw5'].reshape(1, 1, 1, -1)
    dw7 = jax.lax.conv_general_dilated(
        dw5, p['w_dw7'].reshape(7, 7, 1, C), (1, 1), ((9, 9), (9, 9)),
        rhs_dilation=(3, 3), dimension_numbers=dn, feature_group_count=C
    ) + p['b_dw7'].reshape(1, 1, 1, -1)
    attn = conv1x1(dw7, p['w_pw'], p['b_pw'])
    y1 = conv1x1(attn * t1, p['w_proj'], p['b_proj'])
    y2 = conv1x1(attn * t2, p['w_proj'], p['b_proj'])
    return jnp.transpose(y1, (0, 3, 1, 2)), jnp.transpose(y2, (0, 3, 1, 2))


if __name__ == "__main__":
    B, dim, H, W = 2, 8, 16, 16          # W*dim = 128 -> lane-dense fold
    key = jax.random.PRNGKey(0)
    k1, k2, kp = jax.random.split(key, 3)
    x1 = jax.random.normal(k1, (B, dim, H, W), jnp.float32)
    x2 = jax.random.normal(k2, (B, dim, H, W), jnp.float32)
    params = init_params(kp, dim)

    o1, o2 = attention_module2(x1, x2, params)
    jax.block_until_ready((o1, o2))

    r1, r2 = reference(x1, x2, params)
    assert o1.shape == (B, dim, H, W) and o2.shape == (B, dim, H, W)
    err1 = float(jnp.max(jnp.abs(o1 - r1)))
    err2 = float(jnp.max(jnp.abs(o2 - r2)))
    assert jnp.allclose(o1, r1, atol=1e-2, rtol=1e-2), err1
    assert jnp.allclose(o2, r2, atol=1e-2, rtol=1e-2), err2
    print("KERNEL_OK")
</pallas_src>

<mosaic_0001>
module attributes {stable_mosaic.version = 11 : i64} {
  func.func @_attn2_kernel(%arg0: i32, %arg1: memref<2x2x16x128xbf16, #tpu.memory_space<vmem>>, %arg2: memref<128x128xbf16, #tpu.memory_space<vmem>>, %arg3: memref<1x128xf32, #tpu.memory_space<vmem>>, %arg4: memref<256x128xbf16, #tpu.memory_space<vmem>>, %arg5: memref<1x128xf32, #tpu.memory_space<vmem>>, %arg6: memref<640x128xbf16, #tpu.memory_space<vmem>>, %arg7: memref<1x128xf32, #tpu.memory_space<vmem>>, %arg8: memref<896x128xbf16, #tpu.memory_space<vmem>>, %arg9: memref<1x128xf32, #tpu.memory_space<vmem>>, %arg10: memref<128x128xbf16, #tpu.memory_space<vmem>>, %arg11: memref<1x128xf32, #tpu.memory_space<vmem>>, %arg12: memref<128x128xbf16, #tpu.memory_space<vmem>>, %arg13: memref<1x128xf32, #tpu.memory_space<vmem>>, %arg14: memref<2x2x16x128xf32, #tpu.memory_space<vmem>>) attributes {dimension_semantics = [#tpu.dimension_semantics<parallel>], iteration_bounds = array<i64: 1>, scalar_prefetch = 0 : i64, scratch_operands = 0 : i64, tpu.core_type = #tpu.core_type<tc>, window_params = [{transform_indices = @transform_0, window_bounds = array<i64: 2, 2, 16, 128>}, {pipeline_mode = #tpu.pipeline_mode<synchronous>, transform_indices = @transform_1, window_bounds = array<i64: 128, 128>}, {pipeline_mode = #tpu.pipeline_mode<synchronous>, transform_indices = @transform_2, window_bounds = array<i64: 1, 128>}, {pipeline_mode = #tpu.pipeline_mode<synchronous>, transform_indices = @transform_3, window_bounds = array<i64: 256, 128>}, {pipeline_mode = #tpu.pipeline_mode<synchronous>, transform_indices = @transform_4, window_bounds = array<i64: 1, 128>}, {pipeline_mode = #tpu.pipeline_mode<synchronous>, transform_indices = @transform_5, window_bounds = array<i64: 640, 128>}, {pipeline_mode = #tpu.pipeline_mode<synchronous>, transform_indices = @transform_6, window_bounds = array<i64: 1, 128>}, {pipeline_mode = #tpu.pipeline_mode<synchronous>, transform_indices = @transform_7, window_bounds = array<i64: 896, 128>}, {pipeline_mode = #tpu.pipeline_mode<synchronous>, transform_indices = @transform_8, window_bounds = array<i64: 1, 128>}, {pipeline_mode = #tpu.pipeline_mode<synchronous>, transform_indices = @transform_9, window_bounds = array<i64: 128, 128>}, {pipeline_mode = #tpu.pipeline_mode<synchronous>, transform_indices = @transform_10, window_bounds = array<i64: 1, 128>}, {pipeline_mode = #tpu.pipeline_mode<synchronous>, transform_indices = @transform_11, window_bounds = array<i64: 128, 128>}, {pipeline_mode = #tpu.pipeline_mode<synchronous>, transform_indices = @transform_12, window_bounds = array<i64: 1, 128>}, {transform_indices = @transform_13, window_bounds = array<i64: 2, 2, 16, 128>}]} {
    %c0 = arith.constant 0 : index
    %c0_0 = arith.constant 0 : index
    %c0_1 = arith.constant 0 : index
    %c0_2 = arith.constant 0 : index
    %0 = vector.load %arg1[%c0, %c0_0, %c0_1, %c0_2] : memref<2x2x16x128xbf16, #tpu.memory_space<vmem>>, vector<2x2x16x128xbf16>
    %1 = vector.shape_cast %0 : vector<2x2x16x128xbf16> to vector<64x128xbf16>
    %c0_3 = arith.constant 0 : index
    %c0_4 = arith.constant 0 : index
    %2 = vector.load %arg2[%c0_3, %c0_4] : memref<128x128xbf16, #tpu.memory_space<vmem>>, vector<128x128xbf16>
    %cst = arith.constant dense<0.000000e+00> : vector<64x128xf32>
    %3 = tpu.matmul %1, %2, %cst {dimension_numbers = #tpu.dot_dimension_numbers<[1], [0], [0], [1], [0, 0, 1, 1], [], []>} : vector<64x128xbf16>, vector<128x128xbf16>, vector<64x128xf32> -> vector<64x128xf32>
    %c0_5 = arith.constant 0 : index
    %c0_6 = arith.constant 0 : index
    %4 = vector.load %arg3[%c0_5, %c0_6] : memref<1x128xf32, #tpu.memory_space<vmem>>, vector<1x128xf32>
    %5 = vector.broadcast %4 : vector<1x128xf32> to vector<64x128xf32>
    %6 = arith.addf %3, %5 : vector<64x128xf32>
    %cst_7 = arith.constant 5.000000e-01 : f32
    %7 = vector.broadcast %cst_7 : f32 to vector<64x128xf32>
    %8 = arith.mulf %7, %6 : vector<64x128xf32>
    %cst_8 = arith.constant 4.471500e-02 : f32
    %9 = vector.broadcast %cst_8 : f32 to vector<64x128xf32>
    %10 = arith.mulf %9, %6 : vector<64x128xf32>
    %11 = arith.mulf %10, %6 : vector<64x128xf32>
    %12 = arith.mulf %11, %6 : vector<64x128xf32>
    %13 = arith.addf %6, %12 : vector<64x128xf32>
    %cst_9 = arith.constant 0.797884583 : f32
    %14 = vector.broadcast %cst_9 : f32 to vector<64x128xf32>
    %15 = arith.mulf %14, %13 : vector<64x128xf32>
    %16 = math.tanh %15 : vector<64x128xf32>
    %cst_10 = arith.constant 1.000000e+00 : f32
    %17 = vector.broadcast %cst_10 : f32 to vector<64x128xf32>
    %18 = arith.addf %17, %16 : vector<64x128xf32>
    %19 = arith.mulf %8, %18 : vector<64x128xf32>
    %20 = vector.extract_strided_slice %19 {offsets = [0, 0], sizes = [32, 128], strides = [1, 1]} : vector<64x128xf32> to vector<32x128xf32>
    %21 = vector.extract_strided_slice %19 {offsets = [32, 0], sizes = [32, 128], strides = [1, 1]} : vector<64x128xf32> to vector<32x128xf32>
    %22 = tpu.concatenate %20, %21 in 1 : vector<32x128xf32>, vector<32x128xf32> -> vector<32x256xf32>
    %23 = arith.truncf %22 : vector<32x256xf32> to vector<32x256xbf16>
    %c0_11 = arith.constant 0 : index
    %c0_12 = arith.constant 0 : index
    %24 = vector.load %arg4[%c0_11, %c0_12] : memref<256x128xbf16, #tpu.memory_space<vmem>>, vector<256x128xbf16>
    %cst_13 = arith.constant dense<0.000000e+00> : vector<32x128xf32>
    %25 = tpu.matmul %23, %24, %cst_13 {dimension_numbers = #tpu.dot_dimension_numbers<[1], [0], [0], [1], [0, 0, 1, 1], [], []>} : vector<32x256xbf16>, vector<256x128xbf16>, vector<32x128xf32> -> vector<32x128xf32>
    %c0_14 = arith.constant 0 : index
    %c0_15 = arith.constant 0 : index
    %26 = vector.load %arg5[%c0_14, %c0_15] : memref<1x128xf32, #tpu.memory_space<vmem>>, vector<1x128xf32>
    %27 = vector.broadcast %26 : vector<1x128xf32> to vector<32x128xf32>
    %28 = arith.addf %25, %27 : vector<32x128xf32>
    %29 = tpu.iota {dimensions = array<i32: 0>} : vector<32x128xi32>
    %c16_i32 = arith.constant 16 : i32
    %c0_i32 = arith.constant 0 : i32
    %30 = arith.cmpi eq, %c16_i32, %c0_i32 : i32
    %c1_i32 = arith.constant 1 : i32
    %31 = arith.select %30, %c1_i32, %c16_i32 : i32
    %32 = vector.broadcast %31 : i32 to vector<32x128xi32>
    %33 = arith.remsi %29, %32 : vector<32x128xi32>
    %c0_i32_16 = arith.constant 0 : i32
    %34 = vector.broadcast %c0_i32_16 : i32 to vector<32x128xi32>
    %35 = arith.cmpi ne, %33, %34 : vector<32x128xi32>
    %c0_i32_17 = arith.constant 0 : i32
    %36 = vector.broadcast %c0_i32_17 : i32 to vector<32x128xi32>
    %37 = arith.cmpi slt, %33, %36 : vector<32x128xi32>
    %c0_i32_18 = arith.constant 0 : i32
    %38 = arith.cmpi slt, %31, %c0_i32_18 : i32
    %39 = vector.broadcast %38 : i1 to vector<32x128xi1>
    %40 = vector.broadcast %39 : vector<32x128xi1> to vector<32x128xi1>
    %41 = arith.xori %37, %40 : vector<32x128xi1>
    %42 = arith.andi %41, %35 : vector<32x128xi1>
    %43 = vector.broadcast %31 : i32 to vector<32x128xi32>
    %44 = arith.addi %33, %43 : vector<32x128xi32>
    %45 = arith.select %42, %44, %33 : vector<32x128xi1>, vector<32x128xi32>
    %c2_i32 = arith.constant 2 : i32
    %46 = tpu.dynamic_rotate %28 by %c2_i32 dim 0 : vector<32x128xf32>, i32 -> vector<32x128xf32>
    %c-2_i32 = arith.constant -2 : i32
    %47 = vector.broadcast %c-2_i32 : i32 to vector<32x128xi32>
    %48 = arith.addi %45, %47 : vector<32x128xi32>
    %c0_i32_19 = arith.constant 0 : i32
    %49 = vector.broadcast %c0_i32_19 : i32 to vector<32x128xi32>
    %50 = arith.cmpi sge, %48, %49 : vector<32x128xi32>
    %c-2_i32_20 = arith.constant -2 : i32
    %51 = vector.broadcast %c-2_i32_20 : i32 to vector<32x128xi32>
    %52 = arith.addi %45, %51 : vector<32x128xi32>
    %c16_i32_21 = arith.constant 16 : i32
    %53 = vector.broadcast %c16_i32_21 : i32 to vector<32x128xi32>
    %54 = arith.cmpi slt, %52, %53 : vector<32x128xi32>
    %55 = arith.andi %50, %54 : vector<32x128xi1>
    %cst_22 = arith.constant 0.000000e+00 : f32
    %56 = vector.broadcast %cst_22 : f32 to vector<32x128xf32>
    %57 = arith.select %55, %46, %56 : vector<32x128xi1>, vector<32x128xf32>
    %c1_i32_23 = arith.constant 1 : i32
    %58 = tpu.dynamic_rotate %28 by %c1_i32_23 dim 0 : vector<32x128xf32>, i32 -> vector<32x128xf32>
    %c-1_i32 = arith.constant -1 : i32
    %59 = vector.broadcast %c-1_i32 : i32 to vector<32x128xi32>
    %60 = arith.addi %45, %59 : vector<32x128xi32>
    %c0_i32_24 = arith.constant 0 : i32
    %61 = vector.broadcast %c0_i32_24 : i32 to vector<32x128xi32>
    %62 = arith.cmpi sge, %60, %61 : vector<32x128xi32>
    %c-1_i32_25 = arith.constant -1 : i32
    %63 = vector.broadcast %c-1_i32_25 : i32 to vector<32x128xi32>
    %64 = arith.addi %45, %63 : vector<32x128xi32>
    %c16_i32_26 = arith.constant 16 : i32
    %65 = vector.broadcast %c16_i32_26 : i32 to vector<32x128xi32>
    %66 = arith.cmpi slt, %64, %65 : vector<32x128xi32>
    %67 = arith.andi %62, %66 : vector<32x128xi1>
    %cst_27 = arith.constant 0.000000e+00 : f32
    %68 = vector.broadcast %cst_27 : f32 to vector<32x128xf32>
    %69 = arith.select %67, %58, %68 : vector<32x128xi1>, vector<32x128xf32>
    %c31_i32 = arith.constant 31 : i32
    %70 = tpu.dynamic_rotate %28 by %c31_i32 dim 0 : vector<32x128xf32>, i32 -> vector<32x128xf32>
    %c1_i32_28 = arith.constant 1 : i32
    %71 = vector.broadcast %c1_i32_28 : i32 to vector<32x128xi32>
    %72 = arith.addi %45, %71 : vector<32x128xi32>
    %c0_i32_29 = arith.constant 0 : i32
    %73 = vector.broadcast %c0_i32_29 : i32 to vector<32x128xi32>
    %74 = arith.cmpi sge, %72, %73 : vector<32x128xi32>
    %c1_i32_30 = arith.constant 1 : i32
    %75 = vector.broadcast %c1_i32_30 : i32 to vector<32x128xi32>
    %76 = arith.addi %45, %75 : vector<32x128xi32>
    %c16_i32_31 = arith.constant 16 : i32
    %77 = vector.broadcast %c16_i32_31 : i32 to vector<32x128xi32>
    %78 = arith.cmpi slt, %76, %77 : vector<32x128xi32>
    %79 = arith.andi %74, %78 : vector<32x128xi1>
    %cst_32 = arith.constant 0.000000e+00 : f32
    %80 = vector.broadcast %cst_32 : f32 to vector<32x128xf32>
    %81 = arith.select %79, %70, %80 : vector<32x128xi1>, vector<32x128xf32>
    %c30_i32 = arith.constant 30 : i32
    %82 = tpu.dynamic_rotate %28 by %c30_i32 dim 0 : vector<32x128xf32>, i32 -> vector<32x128xf32>
    %c2_i32_33 = arith.constant 2 : i32
    %83 = vector.broadcast %c2_i32_33 : i32 to vector<32x128xi32>
    %84 = arith.addi %45, %83 : vector<32x128xi32>
    %c0_i32_34 = arith.constant 0 : i32
    %85 = vector.broadcast %c0_i32_34 : i32 to vector<32x128xi32>
    %86 = arith.cmpi sge, %84, %85 : vector<32x128xi32>
    %c2_i32_35 = arith.constant 2 : i32
    %87 = vector.broadcast %c2_i32_35 : i32 to vector<32x128xi32>
    %88 = arith.addi %45, %87 : vector<32x128xi32>
    %c16_i32_36 = arith.constant 16 : i32
    %89 = vector.broadcast %c16_i32_36 : i32 to vector<32x128xi32>
    %90 = arith.cmpi slt, %88, %89 : vector<32x128xi32>
    %91 = arith.andi %86, %90 : vector<32x128xi1>
    %cst_37 = arith.constant 0.000000e+00 : f32
    %92 = vector.broadcast %cst_37 : f32 to vector<32x128xf32>
    %93 = arith.select %91, %82, %92 : vector<32x128xi1>, vector<32x128xf32>
    %94 = tpu.concatenate %57, %69, %28, %81, %93 in 1 : vector<32x128xf32>, vector<32x128xf32>, vector<32x128xf32>, vector<32x128xf32>, vector<32x128xf32> -> vector<32x640xf32>
    %95 = arith.truncf %94 : vector<32x640xf32> to vector<32x640xbf16>
    %c0_38 = arith.constant 0 : index
    %c0_39 = arith.constant 0 : index
    %96 = vector.load %arg6[%c0_38, %c0_39] : memref<640x128xbf16, #tpu.memory_space<vmem>>, vector<640x128xbf16>
    %cst_40 = arith.constant dense<0.000000e+00> : vector<32x128xf32>
    %97 = tpu.matmul %95, %96, %cst_40 {dimension_numbers = #tpu.dot_dimension_numbers<[1], [0], [0], [1], [0, 0, 1, 1], [], []>} : vector<32x640xbf16>, vector<640x128xbf16>, vector<32x128xf32> -> vector<32x128xf32>
    %c0_41 = arith.constant 0 : index
    %c0_42 = arith.constant 0 : index
    %98 = vector.load %arg7[%c0_41, %c0_42] : memref<1x128xf32, #tpu.memory_space<vmem>>, vector<1x128xf32>
    %99 = vector.broadcast %98 : vector<1x128xf32> to vector<32x128xf32>
    %100 = arith.addf %97, %99 : vector<32x128xf32>
    %c9_i32 = arith.constant 9 : i32
    %101 = tpu.dynamic_rotate %100 by %c9_i32 dim 0 : vector<32x128xf32>, i32 -> vector<32x128xf32>
    %c-9_i32 = arith.constant -9 : i32
    %102 = vector.broadcast %c-9_i32 : i32 to vector<32x128xi32>
    %103 = arith.addi %45, %102 : vector<32x128xi32>
    %c0_i32_43 = arith.constant 0 : i32
    %104 = vector.broadcast %c0_i32_43 : i32 to vector<32x128xi32>
    %105 = arith.cmpi sge, %103, %104 : vector<32x128xi32>
    %c-9_i32_44 = arith.constant -9 : i32
    %106 = vector.broadcast %c-9_i32_44 : i32 to vector<32x128xi32>
    %107 = arith.addi %45, %106 : vector<32x128xi32>
    %c16_i32_45 = arith.constant 16 : i32
    %108 = vector.broadcast %c16_i32_45 : i32 to vector<32x128xi32>
    %109 = arith.cmpi slt, %107, %108 : vector<32x128xi32>
    %110 = arith.andi %105, %109 : vector<32x128xi1>
    %cst_46 = arith.constant 0.000000e+00 : f32
    %111 = vector.broadcast %cst_46 : f32 to vector<32x128xf32>
    %112 = arith.select %110, %101, %111 : vector<32x128xi1>, vector<32x128xf32>
    %c6_i32 = arith.constant 6 : i32
    %113 = tpu.dynamic_rotate %100 by %c6_i32 dim 0 : vector<32x128xf32>, i32 -> vector<32x128xf32>
    %c-6_i32 = arith.constant -6 : i32
    %114 = vector.broadcast %c-6_i32 : i32 to vector<32x128xi32>
    %115 = arith.addi %45, %114 : vector<32x128xi32>
    %c0_i32_47 = arith.constant 0 : i32
    %116 = vector.broadcast %c0_i32_47 : i32 to vector<32x128xi32>
    %117 = arith.cmpi sge, %115, %116 : vector<32x128xi32>
    %c-6_i32_48 = arith.constant -6 : i32
    %118 = vector.broadcast %c-6_i32_48 : i32 to vector<32x128xi32>
    %119 = arith.addi %45, %118 : vector<32x128xi32>
    %c16_i32_49 = arith.constant 16 : i32
    %120 = vector.broadcast %c16_i32_49 : i32 to vector<32x128xi32>
    %121 = arith.cmpi slt, %119, %120 : vector<32x128xi32>
    %122 = arith.andi %117, %121 : vector<32x128xi1>
    %cst_50 = arith.constant 0.000000e+00 : f32
    %123 = vector.broadcast %cst_50 : f32 to vector<32x128xf32>
    %124 = arith.select %122, %113, %123 : vector<32x128xi1>, vector<32x128xf32>
    %c3_i32 = arith.constant 3 : i32
    %125 = tpu.dynamic_rotate %100 by %c3_i32 dim 0 : vector<32x128xf32>, i32 -> vector<32x128xf32>
    %c-3_i32 = arith.constant -3 : i32
    %126 = vector.broadcast %c-3_i32 : i32 to vector<32x128xi32>
    %127 = arith.addi %45, %126 : vector<32x128xi32>
    %c0_i32_51 = arith.constant 0 : i32
    %128 = vector.broadcast %c0_i32_51 : i32 to vector<32x128xi32>
    %129 = arith.cmpi sge, %127, %128 : vector<32x128xi32>
    %c-3_i32_52 = arith.constant -3 : i32
    %130 = vector.broadcast %c-3_i32_52 : i32 to vector<32x128xi32>
    %131 = arith.addi %45, %130 : vector<32x128xi32>
    %c16_i32_53 = arith.constant 16 : i32
    %132 = vector.broadcast %c16_i32_53 : i32 to vector<32x128xi32>
    %133 = arith.cmpi slt, %131, %132 : vector<32x128xi32>
    %134 = arith.andi %129, %133 : vector<32x128xi1>
    %cst_54 = arith.constant 0.000000e+00 : f32
    %135 = vector.broadcast %cst_54 : f32 to vector<32x128xf32>
    %136 = arith.select %134, %125, %135 : vector<32x128xi1>, vector<32x128xf32>
    %c29_i32 = arith.constant 29 : i32
    %137 = tpu.dynamic_rotate %100 by %c29_i32 dim 0 : vector<32x128xf32>, i32 -> vector<32x128xf32>
    %c3_i32_55 = arith.constant 3 : i32
    %138 = vector.broadcast %c3_i32_55 : i32 to vector<32x128xi32>
    %139 = arith.addi %45, %138 : vector<32x128xi32>
    %c0_i32_56 = arith.constant 0 : i32
    %140 = vector.broadcast %c0_i32_56 : i32 to vector<32x128xi32>
    %141 = arith.cmpi sge, %139, %140 : vector<32x128xi32>
    %c3_i32_57 = arith.constant 3 : i32
    %142 = vector.broadcast %c3_i32_57 : i32 to vector<32x128xi32>
    %143 = arith.addi %45, %142 : vector<32x128xi32>
    %c16_i32_58 = arith.constant 16 : i32
    %144 = vector.broadcast %c16_i32_58 : i32 to vector<32x128xi32>
    %145 = arith.cmpi slt, %143, %144 : vector<32x128xi32>
    %146 = arith.andi %141, %145 : vector<32x128xi1>
    %cst_59 = arith.constant 0.000000e+00 : f32
    %147 = vector.broadcast %cst_59 : f32 to vector<32x128xf32>
    %148 = arith.select %146, %137, %147 : vector<32x128xi1>, vector<32x128xf32>
    %c26_i32 = arith.constant 26 : i32
    %149 = tpu.dynamic_rotate %100 by %c26_i32 dim 0 : vector<32x128xf32>, i32 -> vector<32x128xf32>
    %c6_i32_60 = arith.constant 6 : i32
    %150 = vector.broadcast %c6_i32_60 : i32 to vector<32x128xi32>
    %151 = arith.addi %45, %150 : vector<32x128xi32>
    %c0_i32_61 = arith.constant 0 : i32
    %152 = vector.broadcast %c0_i32_61 : i32 to vector<32x128xi32>
    %153 = arith.cmpi sge, %151, %152 : vector<32x128xi32>
    %c6_i32_62 = arith.constant 6 : i32
    %154 = vector.broadcast %c6_i32_62 : i32 to vector<32x128xi32>
    %155 = arith.addi %45, %154 : vector<32x128xi32>
    %c16_i32_63 = arith.constant 16 : i32
    %156 = vector.broadcast %c16_i32_63 : i32 to vector<32x128xi32>
    %157 = arith.cmpi slt, %155, %156 : vector<32x128xi32>
    %158 = arith.andi %153, %157 : vector<32x128xi1>
    %cst_64 = arith.constant 0.000000e+00 : f32
    %159 = vector.broadcast %cst_64 : f32 to vector<32x128xf32>
    %160 = arith.select %158, %149, %159 : vector<32x128xi1>, vector<32x128xf32>
    %c23_i32 = arith.constant 23 : i32
    %161 = tpu.dynamic_rotate %100 by %c23_i32 dim 0 : vector<32x128xf32>, i32 -> vector<32x128xf32>
    %c9_i32_65 = arith.constant 9 : i32
    %162 = vector.broadcast %c9_i32_65 : i32 to vector<32x128xi32>
    %163 = arith.addi %45, %162 : vector<32x128xi32>
    %c0_i32_66 = arith.constant 0 : i32
    %164 = vector.broadcast %c0_i32_66 : i32 to vector<32x128xi32>
    %165 = arith.cmpi sge, %163, %164 : vector<32x128xi32>
    %c9_i32_67 = arith.constant 9 : i32
    %166 = vector.broadcast %c9_i32_67 : i32 to vector<32x128xi32>
    %167 = arith.addi %45, %166 : vector<32x128xi32>
    %c16_i32_68 = arith.constant 16 : i32
    %168 = vector.broadcast %c16_i32_68 : i32 to vector<32x128xi32>
    %169 = arith.cmpi slt, %167, %168 : vector<32x128xi32>
    %170 = arith.andi %165, %169 : vector<32x128xi1>
    %cst_69 = arith.constant 0.000000e+00 : f32
    %171 = vector.broadcast %cst_69 : f32 to vector<32x128xf32>
    %172 = arith.select %170, %161, %171 : vector<32x128xi1>, vector<32x128xf32>
    %173 = tpu.concatenate %112, %124, %136, %100, %148, %160, %172 in 1 : vector<32x128xf32>, vector<32x128xf32>, vector<32x128xf32>, vector<32x128xf32>, vector<32x128xf32>, vector<32x128xf32>, vector<32x128xf32> -> vector<32x896xf32>
    %174 = arith.truncf %173 : vector<32x896xf32> to vector<32x896xbf16>
    %c0_70 = arith.constant 0 : index
    %c0_71 = arith.constant 0 : index
    %175 = vector.load %arg8[%c0_70, %c0_71] : memref<896x128xbf16, #tpu.memory_space<vmem>>, vector<896x128xbf16>
    %cst_72 = arith.constant dense<0.000000e+00> : vector<32x128xf32>
    %176 = tpu.matmul %174, %175, %cst_72 {dimension_numbers = #tpu.dot_dimension_numbers<[1], [0], [0], [1], [0, 0, 1, 1], [], []>} : vector<32x896xbf16>, vector<896x128xbf16>, vector<32x128xf32> -> vector<32x128xf32>
    %c0_73 = arith.constant 0 : index
    %c0_74 = arith.constant 0 : index
    %177 = vector.load %arg9[%c0_73, %c0_74] : memref<1x128xf32, #tpu.memory_space<vmem>>, vector<1x128xf32>
    %178 = vector.broadcast %177 : vector<1x128xf32> to vector<32x128xf32>
    %179 = arith.addf %176, %178 : vector<32x128xf32>
    %180 = arith.truncf %179 : vector<32x128xf32> to vector<32x128xbf16>
    %c0_75 = arith.constant 0 : index
    %c0_76 = arith.constant 0 : index
    %181 = vector.load %arg10[%c0_75, %c0_76] : memref<128x128xbf16, #tpu.memory_space<vmem>>, vector<128x128xbf16>
    %cst_77 = arith.constant dense<0.000000e+00> : vector<32x128xf32>
    %182 = tpu.matmul %180, %181, %cst_77 {dimension_numbers = #tpu.dot_dimension_numbers<[1], [0], [0], [1], [0, 0, 1, 1], [], []>} : vector<32x128xbf16>, vector<128x128xbf16>, vector<32x128xf32> -> vector<32x128xf32>
    %c0_78 = arith.constant 0 : index
    %c0_79 = arith.constant 0 : index
    %183 = vector.load %arg11[%c0_78, %c0_79] : memref<1x128xf32, #tpu.memory_space<vmem>>, vector<1x128xf32>
    %184 = vector.broadcast %183 : vector<1x128xf32> to vector<32x128xf32>
    %185 = arith.addf %182, %184 : vector<32x128xf32>
    %186 = tpu.concatenate %185, %185 in 0 : vector<32x128xf32>, vector<32x128xf32> -> vector<64x128xf32>
    %187 = arith.mulf %186, %19 : vector<64x128xf32>
    %188 = arith.truncf %187 : vector<64x128xf32> to vector<64x128xbf16>
    %c0_80 = arith.constant 0 : index
    %c0_81 = arith.constant 0 : index
    %189 = vector.load %arg12[%c0_80, %c0_81] : memref<128x128xbf16, #tpu.memory_space<vmem>>, vector<128x128xbf16>
    %cst_82 = arith.constant dense<0.000000e+00> : vector<64x128xf32>
    %190 = tpu.matmul %188, %189, %cst_82 {dimension_numbers = #tpu.dot_dimension_numbers<[1], [0], [0], [1], [0, 0, 1, 1], [], []>} : vector<64x128xbf16>, vector<128x128xbf16>, vector<64x128xf32> -> vector<64x128xf32>
    %c0_83 = arith.constant 0 : index
    %c0_84 = arith.constant 0 : index
    %191 = vector.load %arg13[%c0_83, %c0_84] : memref<1x128xf32, #tpu.memory_space<vmem>>, vector<1x128xf32>
    %192 = vector.broadcast %191 : vector<1x128xf32> to vector<64x128xf32>
    %193 = arith.addf %190, %192 : vector<64x128xf32>
    %194 = vector.shape_cast %193 : vector<64x128xf32> to vector<2x2x16x128xf32>
    %c0_85 = arith.constant 0 : index
    %c0_86 = arith.constant 0 : index
    %c0_87 = arith.constant 0 : index
    %c0_88 = arith.constant 0 : index
    %195 = vector.load %arg14[%c0_85, %c0_86, %c0_87, %c0_88] : memref<2x2x16x128xf32, #tpu.memory_space<vmem>>, vector<2x2x16x128xf32>
    tpu.vector_store %arg14[%c0_85, %c0_86, %c0_87, %c0_88], %194 {strides = array<i32>} : memref<2x2x16x128xf32, #tpu.memory_space<vmem>>, vector<2x2x16x128xf32>,
    return
  }
  func.func @transform_0(%arg0: i32) -> (i32, i32, i32, i32) {
    %c0_i32 = arith.constant 0 : i32
    %c0_i32_0 = arith.constant 0 : i32
    %c0_i32_1 = arith.constant 0 : i32
    %c0_i32_2 = arith.constant 0 : i32
    return %c0_i32, %arg0, %c0_i32_0, %c0_i32_1 : i32, i32, i32, i32
  }
  func.func @transform_1(%arg0: i32) -> (i32, i32) {
    %c0_i32 = arith.constant 0 : i32
    %c0_i32_0 = arith.constant 0 : i32
    %c0_i32_1 = arith.constant 0 : i32
    return %c0_i32, %c0_i32_0 : i32, i32
  }
  func.func @transform_2(%arg0: i32) -> (i32, i32) {
    %c0_i32 = arith.constant 0 : i32
    %c0_i32_0 = arith.constant 0 : i32
    %c0_i32_1 = arith.constant 0 : i32
    return %c0_i32, %c0_i32_0 : i32, i32
  }
  func.func @transform_3(%arg0: i32) -> (i32, i32) {
    %c0_i32 = arith.constant 0 : i32
    %c0_i32_0 = arith.constant 0 : i32
    %c0_i32_1 = arith.constant 0 : i32
    return %c0_i32, %c0_i32_0 : i32, i32
  }
  func.func @transform_4(%arg0: i32) -> (i32, i32) {
    %c0_i32 = arith.constant 0 : i32
    %c0_i32_0 = arith.constant 0 : i32
    %c0_i32_1 = arith.constant 0 : i32
    return %c0_i32, %c0_i32_0 : i32, i32
  }
  func.func @transform_5(%arg0: i32) -> (i32, i32) {
    %c0_i32 = arith.constant 0 : i32
    %c0_i32_0 = arith.constant 0 : i32
    %c0_i32_1 = arith.constant 0 : i32
    return %c0_i32, %c0_i32_0 : i32, i32
  }
  func.func @transform_6(%arg0: i32) -> (i32, i32) {
    %c0_i32 = arith.constant 0 : i32
    %c0_i32_0 = arith.constant 0 : i32
    %c0_i32_1 = arith.constant 0 : i32
    return %c0_i32, %c0_i32_0 : i32, i32
  }
  func.func @transform_7(%arg0: i32) -> (i32, i32) {
    %c0_i32 = arith.constant 0 : i32
    %c0_i32_0 = arith.constant 0 : i32
    %c0_i32_1 = arith.constant 0 : i32
    return %c0_i32, %c0_i32_0 : i32, i32
  }
  func.func @transform_8(%arg0: i32) -> (i32, i32) {
    %c0_i32 = arith.constant 0 : i32
    %c0_i32_0 = arith.constant 0 : i32
    %c0_i32_1 = arith.constant 0 : i32
    return %c0_i32, %c0_i32_0 : i32, i32
  }
  func.func @transform_9(%arg0: i32) -> (i32, i32) {
    %c0_i32 = arith.constant 0 : i32
    %c0_i32_0 = arith.constant 0 : i32
    %c0_i32_1 = arith.constant 0 : i32
    return %c0_i32, %c0_i32_0 : i32, i32
  }
  func.func @transform_10(%arg0: i32) -> (i32, i32) {
    %c0_i32 = arith.constant 0 : i32
    %c0_i32_0 = arith.constant 0 : i32
    %c0_i32_1 = arith.constant 0 : i32
    return %c0_i32, %c0_i32_0 : i32, i32
  }
  func.func @transform_11(%arg0: i32) -> (i32, i32) {
    %c0_i32 = arith.constant 0 : i32
    %c0_i32_0 = arith.constant 0 : i32
    %c0_i32_1 = arith.constant 0 : i32
    return %c0_i32, %c0_i32_0 : i32, i32
  }
  func.func @transform_12(%arg0: i32) -> (i32, i32) {
    %c0_i32 = arith.constant 0 : i32
    %c0_i32_0 = arith.constant 0 : i32
    %c0_i32_1 = arith.constant 0 : i32
    return %c0_i32, %c0_i32_0 : i32, i32
  }
  func.func @transform_13(%arg0: i32) -> (i32, i32, i32, i32) {
    %c0_i32 = arith.constant 0 : i32
    %c0_i32_0 = arith.constant 0 : i32
    %c0_i32_1 = arith.constant 0 : i32
    %c0_i32_2 = arith.constant 0 : i32
    return %c0_i32, %arg0, %c0_i32_0, %c0_i32_1 : i32, i32, i32, i32
  }
}

</mosaic_0001>

<llo_original>
// kernel: tpu_custom_call.1
$region0: #{tpu_custom_call.1}
  #allocation0 [shape = 'u32[]', space=smem, size = 0x4, offset = 0x4, fixed_abs, tag = 'smem constant byte address 0x4 - core index']
  #allocation1 [shape = 'u32[144,128]{1,0:T(1,128)}', space=vmem, size = 0x12000, scoped, tag = 'internal scratch']
  %s0 = inlined_call_operand.hbm [shape: bf16[2,2,16,128], index: 0, kind: input, shape index: {}]
  %s1 = inlined_call_operand.hbm [shape: bf16[128,128], index: 1, kind: input, shape index: {}]
  %s2 = inlined_call_operand.vmem [shape: f32[1,128], index: 2, kind: input, shape index: {}]
  %s3 = inlined_call_operand.hbm [shape: bf16[256,128], index: 3, kind: input, shape index: {}]
  %s4 = inlined_call_operand.vmem [shape: f32[1,128], index: 4, kind: input, shape index: {}]
  %s5 = inlined_call_operand.hbm [shape: bf16[640,128], index: 5, kind: input, shape index: {}]
  %s6 = inlined_call_operand.vmem [shape: f32[1,128], index: 6, kind: input, shape index: {}]
  %s7 = inlined_call_operand.hbm [shape: bf16[896,128], index: 7, kind: input, shape index: {}]
  %s8 = inlined_call_operand.vmem [shape: f32[1,128], index: 8, kind: input, shape index: {}]
  %s9 = inlined_call_operand.hbm [shape: bf16[128,128], index: 9, kind: input, shape index: {}]
  %s10 = inlined_call_operand.vmem [shape: f32[1,128], index: 10, kind: input, shape index: {}]
  %s11 = inlined_call_operand.hbm [shape: bf16[128,128], index: 11, kind: input, shape index: {}]
  %s12 = inlined_call_operand.vmem [shape: f32[1,128], index: 12, kind: input, shape index: {}]
  %s13 = inlined_call_operand.hbm [shape: f32[2,2,16,128], index: 13, kind: output, shape index: {}]
  %s14 = sld [smem:[#allocation0]]
  $region90: #{tpu_custom_call.1} parent=0
    _
  %s16 = ssub.s32 1, %s14
  %s17 = scalar_select 0, %s16, %s14
  $region1: #{tpu_custom_call.1} parent=0
    #allocation2 [shape = 'u8[16384]{0}', space=vmem, size = 0x4000, scoped, tag = 'input window, operand 0, single buffered']
    #allocation3 [shape = 's32[1]{0}', space=sflag, size = 0x4, scoped, tag = 'scoped memory for tpu_custom_call.1']
    #allocation4 [shape = 's32[1]{0}', space=sflag, size = 0x4, scoped, tag = 'scoped memory for tpu_custom_call.1']
    #allocation5 [shape = 'u8[32768]{0}', space=vmem, size = 0x8000, scoped, tag = 'input window, operand 1, single buffered']
    #allocation6 [shape = 's32[1]{0}', space=sflag, size = 0x4, scoped, tag = 'scoped memory for tpu_custom_call.1']
    #allocation7 [shape = 'u8[65536]{0}', space=vmem, size = 0x10000, scoped, tag = 'input window, operand 3, single buffered']
    #allocation8 [shape = 'u8[163840]{0}', space=vmem, size = 0x28000, scoped, tag = 'input window, operand 5, single buffered']
    #allocation9 [shape = 's32[1]{0}', space=sflag, size = 0x4, scoped, tag = 'scoped memory for tpu_custom_call.1']
    #allocation10 [shape = 'u8[229376]{0}', space=vmem, size = 0x38000, scoped, tag = 'input window, operand 7, single buffered']
    #allocation11 [shape = 'u8[32768]{0}', space=vmem, size = 0x8000, scoped, tag = 'input window, operand 9, single buffered']
    #allocation12 [shape = 's32[1]{0}', space=sflag, size = 0x4, scoped, tag = 'scoped memory for tpu_custom_call.1']
    #allocation13 [shape = 'u8[32768]{0}', space=vmem, size = 0x8000, scoped, tag = 'input window, operand 11, single buffered']
    #allocation14 [shape = 'u8[32768]{0}', space=vmem, size = 0x8000, scoped, tag = 'output window, operand 0, single buffered']
    %18 = vsyncpa [#allocation3], 0
    %19 = vsyncpa [#allocation6], 0
    %20 = vsyncpa [#allocation9], 0
    %21 = vsyncpa [#allocation12], 0
    %22 = vsyncpa [#allocation4], 0
    // Predicated region
    $region2: #{tpu_custom_call.1} parent=1 // pred_check
      _
    $region3: #{tpu_custom_call.1} parent=1 // pred_check_branch
      %24 = sbr.rel (0) target = $region5
    $region4: #{tpu_custom_call.1} parent=1 // pred_region
      %s26 = ssub.s32 512, 512
      %27 = vsyncadd [#allocation3], %s26
      %s28 = sshll.u32 [#allocation2], 4
      %s29 = int_to_ptr.vmem [resolvable:$true] %s28
      %34 = dma.hbm_to_vmem [thread:$0]  %s0, 512, %s29, [#allocation3], 64, 64, 4
    $region5: #{tpu_custom_call.1} parent=1 // pred_fallthru
      _
    // Predicated region
    $region6: #{tpu_custom_call.1} parent=1 // pred_check
      _
    $region7: #{tpu_custom_call.1} parent=1 // pred_check_branch
      %36 = sbr.rel (0) target = $region9
    $region8: #{tpu_custom_call.1} parent=1 // pred_region
      %s38 = ssub.s32 1024, 1024
      %39 = vsyncadd [#allocation6], %s38
      %s40 = sshll.u32 [#allocation5], 4
      %s41 = int_to_ptr.vmem [resolvable:$true] %s40
      %46 = dma.hbm_to_vmem [thread:$0]  %s1, 1024, %s41, [#allocation6], 64, 64, 4
    $region9: #{tpu_custom_call.1} parent=1 // pred_fallthru
      _
    // Predicated region
    $region10: #{tpu_custom_call.1} parent=1 // pred_check
      _
    $region11: #{tpu_custom_call.1} parent=1 // pred_check_branch
      %48 = sbr.rel (0) target = $region13
    $region12: #{tpu_custom_call.1} parent=1 // pred_region
      _
    $region13: #{tpu_custom_call.1} parent=1 // pred_fallthru
      _
    // Predicated region
    $region14: #{tpu_custom_call.1} parent=1 // pred_check
      _
    $region15: #{tpu_custom_call.1} parent=1 // pred_check_branch
      %50 = sbr.rel (0) target = $region17
    $region16: #{tpu_custom_call.1} parent=1 // pred_region
      %s52 = ssub.s32 2048, 2048
      %53 = vsyncadd [#allocation6], %s52
      %s54 = sshll.u32 [#allocation7], 4
      %s55 = int_to_ptr.vmem [resolvable:$true] %s54
      %60 = dma.hbm_to_vmem [thread:$0]  %s3, 2048, %s55, [#allocation6], 64, 64, 4
    $region17: #{tpu_custom_call.1} parent=1 // pred_fallthru
      _
    // Predicated region
    $region18: #{tpu_custom_call.1} parent=1 // pred_check
      _
    $region19: #{tpu_custom_call.1} parent=1 // pred_check_branch
      %62 = sbr.rel (0) target = $region21
    $region20: #{tpu_custom_call.1} parent=1 // pred_region
      _
    $region21: #{tpu_custom_call.1} parent=1 // pred_fallthru
      _
    // Predicated region
    $region22: #{tpu_custom_call.1} parent=1 // pred_check
      _
    $region23: #{tpu_custom_call.1} parent=1 // pred_check_branch
      %64 = sbr.rel (0) target = $region25
    $region24: #{tpu_custom_call.1} parent=1 // pred_region
      %s66 = ssub.s32 5120, 5120
      %67 = vsyncadd [#allocation9], %s66
      %s68 = sshll.u32 [#allocation8], 4
      %s69 = int_to_ptr.vmem [resolvable:$true] %s68
      %74 = dma.hbm_to_vmem [thread:$0]  %s5, 5120, %s69, [#allocation9], 64, 64, 4
    $region25: #{tpu_custom_call.1} parent=1 // pred_fallthru
      _
    // Predicated region
    $region26: #{tpu_custom_call.1} parent=1 // pred_check
      _
    $region27: #{tpu_custom_call.1} parent=1 // pred_check_branch
      %76 = sbr.rel (0) target = $region29
    $region28: #{tpu_custom_call.1} parent=1 // pred_region
      _
    $region29: #{tpu_custom_call.1} parent=1 // pred_fallthru
      _
    // Predicated region
    $region30: #{tpu_custom_call.1} parent=1 // pred_check
      _
    $region31: #{tpu_custom_call.1} parent=1 // pred_check_branch
      %78 = sbr.rel (0) target = $region33
    $region32: #{tpu_custom_call.1} parent=1 // pred_region
      %s80 = ssub.s32 7168, 7168
      %81 = vsyncadd [#allocation9], %s80
      %s82 = sshll.u32 [#allocation10], 4
      %s83 = int_to_ptr.vmem [resolvable:$true] %s82
      %88 = dma.hbm_to_vmem [thread:$0]  %s7, 7168, %s83, [#allocation9], 64, 64, 4
    $region33: #{tpu_custom_call.1} parent=1 // pred_fallthru
      _
    // Predicated region
    $region34: #{tpu_custom_call.1} parent=1 // pred_check
      _
    $region35: #{tpu_custom_call.1} parent=1 // pred_check_branch
      %90 = sbr.rel (0) target = $region37
    $region36: #{tpu_custom_call.1} parent=1 // pred_region
      _
    $region37: #{tpu_custom_call.1} parent=1 // pred_fallthru
      _
    // Predicated region
    $region38: #{tpu_custom_call.1} parent=1 // pred_check
      _
    $region39: #{tpu_custom_call.1} parent=1 // pred_check_branch
      %92 = sbr.rel (0) target = $region41
    $region40: #{tpu_custom_call.1} parent=1 // pred_region
      %s94 = ssub.s32 1024, 1024
      %95 = vsyncadd [#allocation12], %s94
      %s96 = sshll.u32 [#allocation11], 4
      %s97 = int_to_ptr.vmem [resolvable:$true] %s96
      %102 = dma.hbm_to_vmem [thread:$0]  %s9, 1024, %s97, [#allocation12], 64, 64, 4
    $region41: #{tpu_custom_call.1} parent=1 // pred_fallthru
      _
    // Predicated region
    $region42: #{tpu_custom_call.1} parent=1 // pred_check
      _
    $region43: #{tpu_custom_call.1} parent=1 // pred_check_branch
      %104 = sbr.rel (0) target = $region45
    $region44: #{tpu_custom_call.1} parent=1 // pred_region
      _
    $region45: #{tpu_custom_call.1} parent=1 // pred_fallthru
      _
    // Predicated region
    $region46: #{tpu_custom_call.1} parent=1 // pred_check
      _
    $region47: #{tpu_custom_call.1} parent=1 // pred_check_branch
      %106 = sbr.rel (0) target = $region49
    $region48: #{tpu_custom_call.1} parent=1 // pred_region
      %s108 = ssub.s32 1024, 1024
      %109 = vsyncadd [#allocation12], %s108
      %s110 = sshll.u32 [#allocation13], 4
      %s111 = int_to_ptr.vmem [resolvable:$true] %s110
      %116 = dma.hbm_to_vmem [thread:$0]  %s11, 1024, %s111, [#allocation12], 64, 64, 4
    $region49: #{tpu_custom_call.1} parent=1 // pred_fallthru
      _
    // Predicated region
    $region50: #{tpu_custom_call.1} parent=1 // pred_check
      _
    $region51: #{tpu_custom_call.1} parent=1 // pred_check_branch
      %118 = sbr.rel (0) target = $region53
    $region52: #{tpu_custom_call.1} parent=1 // pred_region
      _
    $region53: #{tpu_custom_call.1} parent=1 // pred_fallthru
      _
    // Predicated region
    $region54: #{tpu_custom_call.1} parent=1 // pred_check
      _
    $region55: #{tpu_custom_call.1} parent=1 // pred_check_branch
      %120 = sbr.rel (0) target = $region57
    $region56: #{tpu_custom_call.1} parent=1 // pred_region
      %121 = dma.done [#allocation3], 512
    $region57: #{tpu_custom_call.1} parent=1 // pred_fallthru
      _
    // Predicated region
    $region58: #{tpu_custom_call.1} parent=1 // pred_check
      _
    $region59: #{tpu_custom_call.1} parent=1 // pred_check_branch
      %123 = sbr.rel (0) target = $region61
    $region60: #{tpu_custom_call.1} parent=1 // pred_region
      %124 = dma.done [#allocation6], 1024
    $region61: #{tpu_custom_call.1} parent=1 // pred_fallthru
      _
    // Predicated region
    $region62: #{tpu_custom_call.1} parent=1 // pred_check
      _
    $region63: #{tpu_custom_call.1} parent=1 // pred_check_branch
      %126 = sbr.rel (0) target = $region65
    $region64: #{tpu_custom_call.1} parent=1 // pred_region
      %127 = dma.done [#allocation6], 2048
    $region65: #{tpu_custom_call.1} parent=1 // pred_fallthru
      _
    // Predicated region
    $region66: #{tpu_custom_call.1} parent=1 // pred_check
      _
    $region67: #{tpu_custom_call.1} parent=1 // pred_check_branch
      %129 = sbr.rel (0) target = $region69
    $region68: #{tpu_custom_call.1} parent=1 // pred_region
      %130 = dma.done [#allocation9], 5120
    $region69: #{tpu_custom_call.1} parent=1 // pred_fallthru
      _
    // Predicated region
    $region70: #{tpu_custom_call.1} parent=1 // pred_check
      _
    $region71: #{tpu_custom_call.1} parent=1 // pred_check_branch
      %132 = sbr.rel (0) target = $region73
    $region72: #{tpu_custom_call.1} parent=1 // pred_region
      %133 = dma.done [#allocation9], 7168
    $region73: #{tpu_custom_call.1} parent=1 // pred_fallthru
      _
    // Predicated region
    $region74: #{tpu_custom_call.1} parent=1 // pred_check
      _
    $region75: #{tpu_custom_call.1} parent=1 // pred_check_branch
      %135 = sbr.rel (0) target = $region77
    $region76: #{tpu_custom_call.1} parent=1 // pred_region
      %136 = dma.done [#allocation12], 1024
    $region77: #{tpu_custom_call.1} parent=1 // pred_fallthru
      _
    // Predicated region
    $region78: #{tpu_custom_call.1} parent=1 // pred_check
      _
    $region79: #{tpu_custom_call.1} parent=1 // pred_check_branch
      %138 = sbr.rel (0) target = $region81
    $region80: #{tpu_custom_call.1} parent=1 // pred_region
      %139 = dma.done [#allocation12], 1024
    $region81: #{tpu_custom_call.1} parent=1 // pred_fallthru
      _
    %v141 = vld [vmem:[#allocation2] sm:$0xf]
    %v142 = vld [vmem:[#allocation2 + $0x4] sm:$0xf]
    %v143 = vld [vmem:[#allocation2 + $0x8] sm:$0xf]
    %v144 = vld [vmem:[#allocation2 + $0xc] sm:$0xf]
    %v145 = vld [vmem:[#allocation2 + $0x10] sm:$0xf]
    %v146 = vld [vmem:[#allocation2 + $0x14] sm:$0xf]
    %v147 = vld [vmem:[#allocation2 + $0x18] sm:$0xf]
    %v148 = vld [vmem:[#allocation2 + $0x1c] sm:$0xf]
    %v149 = vld [vmem:[#allocation5] sm:$0xf]
    %v150 = vld [vmem:[#allocation5 + $0x4] sm:$0xf]
    %v151 = vld [vmem:[#allocation5 + $0x8] sm:$0xf]
    %v152 = vld [vmem:[#allocation5 + $0xc] sm:$0xf]
    %v153 = vld [vmem:[#allocation5 + $0x10] sm:$0xf]
    %v154 = vld [vmem:[#allocation5 + $0x14] sm:$0xf]
    %v155 = vld [vmem:[#allocation5 + $0x18] sm:$0xf]
    %v156 = vld [vmem:[#allocation5 + $0x1c] sm:$0xf]
    %v157 = vld [vmem:[#allocation5 + $0x20] sm:$0xf]
    %v158 = vld [vmem:[#allocation5 + $0x24] sm:$0xf]
    %v159 = vld [vmem:[#allocation5 + $0x28] sm:$0xf]
    %v160 = vld [vmem:[#allocation5 + $0x2c] sm:$0xf]
    %v161 = vld [vmem:[#allocation5 + $0x30] sm:$0xf]
    %v162 = vld [vmem:[#allocation5 + $0x34] sm:$0xf]
    %v163 = vld [vmem:[#allocation5 + $0x38] sm:$0xf]
    %v164 = vld [vmem:[#allocation5 + $0x3c] sm:$0xf]
    %v165 = vld [vmem:[%s2] sm:$0x1]
    %v167 = vlaneseq
    %v168 = vshrl.u32 %v167, 7
    %v169 = vsub.s32 0, %v168
    %v170 = vrot.slane %v165, %v169
    %v180 = vunpack.c.l.b16 %v141
    %v181 = vunpack.c.l.b16 %v142
    %v182 = vunpack.c.l.b16 %v143
    %v183 = vunpack.c.l.b16 %v144
    %v184 = vunpack.c.l.b16 %v145
    %v185 = vunpack.c.l.b16 %v146
    %v186 = vunpack.c.l.b16 %v147
    %v187 = vunpack.c.l.b16 %v148
    %v188 = vpack.c.b16 %v181, %v180
    %v189 = vpack.c.b16 %v183, %v182
    %v190 = vpack.c.b16 %v185, %v184
    %v191 = vpack.c.b16 %v187, %v186
    %v212 = vunpack.c.l.b16 %v149
    %v213 = vunpack.c.l.b16 %v150
    %v214 = vunpack.c.l.b16 %v151
    %v215 = vunpack.c.l.b16 %v152
    %v216 = vunpack.c.l.b16 %v153
    %v217 = vunpack.c.l.b16 %v154
    %v218 = vunpack.c.l.b16 %v155
    %v219 = vunpack.c.l.b16 %v156
    %v220 = vunpack.c.l.b16 %v157
    %v221 = vunpack.c.l.b16 %v158
    %v222 = vunpack.c.l.b16 %v159
    %v223 = vunpack.c.l.b16 %v160
    %v224 = vunpack.c.l.b16 %v161
    %v225 = vunpack.c.l.b16 %v162
    %v226 = vunpack.c.l.b16 %v163
    %v227 = vunpack.c.l.b16 %v164
    %v228 = vpack.c.b16 %v213, %v212
    %v229 = vpack.c.b16 %v215, %v214
    %v230 = vpack.c.b16 %v217, %v216
    %v231 = vpack.c.b16 %v219, %v218
    %v232 = vpack.c.b16 %v221, %v220
    %v233 = vpack.c.b16 %v223, %v222
    %v234 = vpack.c.b16 %v225, %v224
    %v235 = vpack.c.b16 %v227, %v226
    %244 = vmatprep.subr.bf16.mxu0 0
    %245 = vmatpush1.bf16.msra.mxu0 %v228
    %246 = vmatprep.subr.bf16.mxu0 0
    %247 = vmatpush1.bf16.msra.mxu0 %v229
    %248 = vmatprep.subr.bf16.mxu0 0
    %249 = vmatpush1.bf16.msra.mxu0 %v230
    %250 = vmatprep.subr.bf16.mxu0 0
    %251 = vmatpush1.bf16.msra.mxu0 %v231
    %252 = vmatprep.subr.bf16.mxu0 0
    %253 = vmatpush1.bf16.msra.mxu0 %v232
    %254 = vmatprep.subr.bf16.mxu0 0
    %255 = vmatpush1.bf16.msra.mxu0 %v233
    %256 = vmatprep.subr.bf16.mxu0 0
    %257 = vmatpush1.bf16.msra.mxu0 %v234
    %258 = vmatprep.subr.bf16.mxu0 0
    %259 = vmatpush1.bf16.msra.mxu0 %v235
    %260 = vmatprep.subr.bf16.mxu0 0
    %261 = vmatpush1.bf16.msra.mxu0 0
    %262 = vmatprep.subr.bf16.mxu0 0
    %263 = vmatpush1.bf16.msra.mxu0 0
    %264 = vmatprep.subr.bf16.mxu0 0
    %265 = vmatpush1.bf16.msra.mxu0 0
    %266 = vmatprep.subr.bf16.mxu0 0
    %267 = vmatpush1.bf16.msra.mxu0 0
    %268 = vmatprep.subr.bf16.mxu0 0
    %269 = vmatpush1.bf16.msra.mxu0 0
    %270 = vmatprep.subr.bf16.mxu0 0
    %271 = vmatpush1.bf16.msra.mxu0 0
    %272 = vmatprep.subr.bf16.mxu0 0
    %273 = vmatpush1.bf16.msra.mxu0 0
    %274 = vmatprep.subr.bf16.mxu0 0
    %275 = vmatpush1.bf16.msra.mxu0 0
    %276 = vmatprep.mubr.bf16.mxu0 0
    %277 = vmatmul.mubr.bf16.gmra.mrb[0].mxu0 %v188
    %v278 = vpop.f32.mrb[0].mxu0
    %v279 = vadd.f32 %v170, %v278
    %v280 = vpop.f32.mrb[0].mxu0
    %v281 = vpop.f32.mrb[0].mxu0
    %v282 = vadd.f32 %v170, %v281
    %v283 = vpop.f32.mrb[0].mxu0
    %284 = vmatprep.mubr.bf16.mxu0 0
    %285 = vmatmul.mubr.bf16.gmra.mrb[0].mxu0 %v189
    %v286 = vpop.f32.mrb[0].mxu0
    %v287 = vadd.f32 %v170, %v286
    %v288 = vpop.f32.mrb[0].mxu0
    %v289 = vpop.f32.mrb[0].mxu0
    %v290 = vadd.f32 %v170, %v289
    %v291 = vpop.f32.mrb[0].mxu0
    %292 = vmatprep.mubr.bf16.mxu0 0
    %293 = vmatmul.mubr.bf16.gmra.mrb[0].mxu0 %v190
    %v294 = vpop.f32.mrb[0].mxu0
    %v295 = vadd.f32 %v170, %v294
    %v296 = vpop.f32.mrb[0].mxu0
    %v297 = vpop.f32.mrb[0].mxu0
    %v298 = vadd.f32 %v170, %v297
    %v299 = vpop.f32.mrb[0].mxu0
    %300 = vmatprep.mubr.bf16.mxu0 0
    %301 = vmatmul.mubr.bf16.gmra.mrb[0].mxu0 %v191
    %v302 = vpop.f32.mrb[0].mxu0
    %v303 = vadd.f32 %v170, %v302
    %v304 = vpop.f32.mrb[0].mxu0
    %v305 = vpop.f32.mrb[0].mxu0
    %v306 = vadd.f32 %v170, %v305
    %v307 = vpop.f32.mrb[0].mxu0
    %308 = vdwg.mxu0
    %v309 = vmul.f32 %v279, 0.5
    %v310 = vmul.f32 %v282, 0.5
    %v311 = vmul.f32 %v287, 0.5
    %v312 = vmul.f32 %v290, 0.5
    %v313 = vmul.f32 %v295, 0.5
    %v314 = vmul.f32 %v298, 0.5
    %v315 = vmul.f32 %v303, 0.5
    %v316 = vmul.f32 %v306, 0.5
    %v317 = vmul.f32 %v279, 0.044715
    %v318 = vmul.f32 %v282, 0.044715
    %v319 = vmul.f32 %v287, 0.044715
    %v320 = vmul.f32 %v290, 0.044715
    %v321 = vmul.f32 %v295, 0.044715
    %v322 = vmul.f32 %v298, 0.044715
    %v323 = vmul.f32 %v303, 0.044715
    %v324 = vmul.f32 %v306, 0.044715
    %v325 = vmul.f32 %v317, %v279
    %v326 = vmul.f32 %v318, %v282
    %v327 = vmul.f32 %v319, %v287
    %v328 = vmul.f32 %v320, %v290
    %v329 = vmul.f32 %v321, %v295
    %v330 = vmul.f32 %v322, %v298
    %v331 = vmul.f32 %v323, %v303
    %v332 = vmul.f32 %v324, %v306
    %v333 = vmul.f32 %v325, %v279
    %v334 = vmul.f32 %v326, %v282
    %v335 = vmul.f32 %v327, %v287
    %v336 = vmul.f32 %v328, %v290
    %v337 = vmul.f32 %v329, %v295
    %v338 = vmul.f32 %v330, %v298
    %v339 = vmul.f32 %v331, %v303
    %v340 = vmul.f32 %v332, %v306
    %v341 = vadd.f32 %v279, %v333
    %v342 = vadd.f32 %v282, %v334
    %v343 = vadd.f32 %v287, %v335
    %v344 = vadd.f32 %v290, %v336
    %v345 = vadd.f32 %v295, %v337
    %v346 = vadd.f32 %v298, %v338
    %v347 = vadd.f32 %v303, %v339
    %v348 = vadd.f32 %v306, %v340
    %v349 = vmul.f32 %v341, 0.7978846
    %v350 = vmul.f32 %v342, 0.7978846
    %v351 = vmul.f32 %v343, 0.7978846
    %v352 = vmul.f32 %v344, 0.7978846
    %v353 = vmul.f32 %v345, 0.7978846
    %v354 = vmul.f32 %v346, 0.7978846
    %v355 = vmul.f32 %v347, 0.7978846
    %v356 = vmul.f32 %v348, 0.7978846
    %v357 = vtanh.pop %v349
    %v358 = vtanh.pop %v350
    %v359 = vtanh.pop %v351
    %v360 = vtanh.pop %v352
    %v361 = vtanh.pop %v353
    %v362 = vtanh.pop %v354
    %v363 = vtanh.pop %v355
    %v364 = vtanh.pop %v356
    %v365 = vadd.f32 %v357, 1.0
    %v366 = vadd.f32 %v358, 1.0
    %v367 = vadd.f32 %v359, 1.0
    %v368 = vadd.f32 %v360, 1.0
    %v369 = vadd.f32 %v361, 1.0
    %v370 = vadd.f32 %v362, 1.0
    %v371 = vadd.f32 %v363, 1.0
    %v372 = vadd.f32 %v364, 1.0
    %v373 = vmul.f32 %v309, %v365
    %v374 = vmul.f32 %v310, %v366
    %v375 = vmul.f32 %v311, %v367
    %v376 = vmul.f32 %v312, %v368
    %v377 = vmul.f32 %v313, %v369
    %v378 = vmul.f32 %v314, %v370
    %v379 = vmul.f32 %v315, %v371
    %v380 = vmul.f32 %v316, %v372
    %v381 = vpack.c.bf16 %v374, %v373
    %v382 = vpack.c.bf16 %v378, %v377
    %v383 = vpack.c.bf16 %v376, %v375
    %v384 = vpack.c.bf16 %v380, %v379
    %v385 = vld [vmem:[#allocation7] sm:$0xf]
    %v386 = vld [vmem:[#allocation7 + $0x4] sm:$0xf]
    %v387 = vld [vmem:[#allocation7 + $0x8] sm:$0xf]
    %v388 = vld [vmem:[#allocation7 + $0xc] sm:$0xf]
    %v389 = vld [vmem:[#allocation7 + $0x10] sm:$0xf]
    %v390 = vld [vmem:[#allocation7 + $0x14] sm:$0xf]
    %v391 = vld [vmem:[#allocation7 + $0x18] sm:$0xf]
    %v392 = vld [vmem:[#allocation7 + $0x1c] sm:$0xf]
    %v393 = vld [vmem:[#allocation7 + $0x20] sm:$0xf]
    %v394 = vld [vmem:[#allocation7 + $0x24] sm:$0xf]
    %v395 = vld [vmem:[#allocation7 + $0x28] sm:$0xf]
    %v396 = vld [vmem:[#allocation7 + $0x2c] sm:$0xf]
    %v397 = vld [vmem:[#allocation7 + $0x30] sm:$0xf]
    %v398 = vld [vmem:[#allocation7 + $0x34] sm:$0xf]
    %v399 = vld [vmem:[#allocation7 + $0x38] sm:$0xf]
    %v400 = vld [vmem:[#allocation7 + $0x3c] sm:$0xf]
    %v401 = vld [vmem:[#allocation7 + $0x40] sm:$0xf]
    %v402 = vld [vmem:[#allocation7 + $0x44] sm:$0xf]
    %v403 = vld [vmem:[#allocation7 + $0x48] sm:$0xf]
    %v404 = vld [vmem:[#allocation7 + $0x4c] sm:$0xf]
    %v405 = vld [vmem:[#allocation7 + $0x50] sm:$0xf]
    %v406 = vld [vmem:[#allocation7 + $0x54] sm:$0xf]
    %v407 = vld [vmem:[#allocation7 + $0x58] sm:$0xf]
    %v408 = vld [vmem:[#allocation7 + $0x5c] sm:$0xf]
    %v409 = vld [vmem:[#allocation7 + $0x60] sm:$0xf]
    %v410 = vld [vmem:[#allocation7 + $0x64] sm:$0xf]
    %v411 = vld [vmem:[#allocation7 + $0x68] sm:$0xf]
    %v412 = vld [vmem:[#allocation7 + $0x6c] sm:$0xf]
    %v413 = vld [vmem:[#allocation7 + $0x70] sm:$0xf]
    %v414 = vld [vmem:[#allocation7 + $0x74] sm:$0xf]
    %v415 = vld [vmem:[#allocation7 + $0x78] sm:$0xf]
    %v416 = vld [vmem:[#allocation7 + $0x7c] sm:$0xf]
    %v417 = vld [vmem:[%s4] sm:$0x1]
    %v419 = vlaneseq
    %v420 = vshrl.u32 %v419, 7
    %v421 = vsub.s32 0, %v420
    %v422 = vrot.slane %v417, %v421
    %v456 = vunpack.c.l.b16 %v385
    %v457 = vunpack.c.l.b16 %v386
    %v458 = vunpack.c.l.b16 %v387
    %v459 = vunpack.c.l.b16 %v388
    %v460 = vunpack.c.l.b16 %v389
    %v461 = vunpack.c.l.b16 %v390
    %v462 = vunpack.c.l.b16 %v391
    %v463 = vunpack.c.l.b16 %v392
    %v464 = vunpack.c.l.b16 %v393
    %v465 = vunpack.c.l.b16 %v394
    %v466 = vunpack.c.l.b16 %v395
    %v467 = vunpack.c.l.b16 %v396
    %v468 = vunpack.c.l.b16 %v397
    %v469 = vunpack.c.l.b16 %v398
    %v470 = vunpack.c.l.b16 %v399
    %v471 = vunpack.c.l.b16 %v400
    %v472 = vunpack.c.l.b16 %v401
    %v473 = vunpack.c.l.b16 %v402
    %v474 = vunpack.c.l.b16 %v403
    %v475 = vunpack.c.l.b16 %v404
    %v476 = vunpack.c.l.b16 %v405
    %v477 = vunpack.c.l.b16 %v406
    %v478 = vunpack.c.l.b16 %v407
    %v479 = vunpack.c.l.b16 %v408
    %v480 = vunpack.c.l.b16 %v409
    %v481 = vunpack.c.l.b16 %v410
    %v482 = vunpack.c.l.b16 %v411
    %v483 = vunpack.c.l.b16 %v412
    %v484 = vunpack.c.l.b16 %v413
    %v485 = vunpack.c.l.b16 %v414
    %v486 = vunpack.c.l.b16 %v415
    %v487 = vunpack.c.l.b16 %v416
    %v488 = vpack.c.b16 %v457, %v456
    %v489 = vpack.c.b16 %v459, %v458
    %v490 = vpack.c.b16 %v461, %v460
    %v491 = vpack.c.b16 %v463, %v462
    %v492 = vpack.c.b16 %v465, %v464
    %v493 = vpack.c.b16 %v467, %v466
    %v494 = vpack.c.b16 %v469, %v468
    %v495 = vpack.c.b16 %v471, %v470
    %v496 = vpack.c.b16 %v473, %v472
    %v497 = vpack.c.b16 %v475, %v474
    %v498 = vpack.c.b16 %v477, %v476
    %v499 = vpack.c.b16 %v479, %v478
    %v500 = vpack.c.b16 %v481, %v480
    %v501 = vpack.c.b16 %v483, %v482
    %v502 = vpack.c.b16 %v485, %v484
    %v503 = vpack.c.b16 %v487, %v486
    %520 = vmatprep.subr.bf16.mxu0 0
    %521 = vmatpush1.bf16.msra.mxu0 %v488
    %522 = vmatprep.subr.bf16.mxu0 0
    %523 = vmatpush1.bf16.msra.mxu0 %v489
    %524 = vmatprep.subr.bf16.mxu0 0
    %525 = vmatpush1.bf16.msra.mxu0 %v490
    %526 = vmatprep.subr.bf16.mxu0 0
    %527 = vmatpush1.bf16.msra.mxu0 %v491
    %528 = vmatprep.subr.bf16.mxu0 0
    %529 = vmatpush1.bf16.msra.mxu0 %v492
    %530 = vmatprep.subr.bf16.mxu0 0
    %531 = vmatpush1.bf16.msra.mxu0 %v493
    %532 = vmatprep.subr.bf16.mxu0 0
    %533 = vmatpush1.bf16.msra.mxu0 %v494
    %534 = vmatprep.subr.bf16.mxu0 0
    %535 = vmatpush1.bf16.msra.mxu0 %v495
    %536 = vmatprep.subr.bf16.mxu0 0
    %537 = vmatpush1.bf16.msra.mxu0 %v496
    %538 = vmatprep.subr.bf16.mxu0 0
    %539 = vmatpush1.bf16.msra.mxu0 %v497
    %540 = vmatprep.subr.bf16.mxu0 0
    %541 = vmatpush1.bf16.msra.mxu0 %v498
    %542 = vmatprep.subr.bf16.mxu0 0
    %543 = vmatpush1.bf16.msra.mxu0 %v499
    %544 = vmatprep.subr.bf16.mxu0 0
    %545 = vmatpush1.bf16.msra.mxu0 %v500
    %546 = vmatprep.subr.bf16.mxu0 0
    %547 = vmatpush1.bf16.msra.mxu0 %v501
    %548 = vmatprep.subr.bf16.mxu0 0
    %549 = vmatpush1.bf16.msra.mxu0 %v502
    %550 = vmatprep.subr.bf16.mxu0 0
    %551 = vmatpush1.bf16.msra.mxu0 %v503
    %552 = vmatprep.mubr.bf16.mxu0 %v382
    %553 = vmatmul.mubr.bf16.gmra.mrb[0].mxu0 %v381
    %v554 = vpop.f32.mrb[0].mxu0
    %v555 = vadd.f32 %v422, %v554
    %v556 = vpop.f32.mrb[0].mxu0
    %v557 = vpop.f32.mrb[0].mxu0
    %v558 = vadd.f32 %v422, %v557
    %v559 = vpop.f32.mrb[0].mxu0
    %560 = vmatprep.mubr.bf16.mxu0 %v384
    %561 = vmatmul.mubr.bf16.gmra.mrb[0].mxu0 %v383
    %v562 = vpop.f32.mrb[0].mxu0
    %v563 = vadd.f32 %v422, %v562
    %v564 = vpop.f32.mrb[0].mxu0
    %v565 = vpop.f32.mrb[0].mxu0
    %v566 = vadd.f32 %v422, %v565
    %v567 = vpop.f32.mrb[0].mxu0
    %568 = vdwg.mxu0
    %v569 = vlaneseq
    %v570 = vshrl.u32 %v569, 7
    %v571 = vadd.s32 %v570, 8
    %v572 = vadd.s32 %v570, 16
    %v573 = vadd.s32 %v570, 24
    %vm574 = vcmp.lt.s32.totalorder %v570, 0
    %v575 = vsub.s32 0, %v570
    %v576 = vsel %vm574, %v575, %v570
    %v577 = vshrl.u32 %v576, 4
    %v578 = vand.u32 %v576, 15
    %v579 = vsub.s32 0, %v578
    %v580 = vsel %vm574, %v579, %v578
    %vm581 = vcmp.lt.s32.totalorder %v571, 0
    %v582 = vsub.s32 0, %v571
    %v583 = vsel %vm581, %v582, %v571
    %v584 = vshrl.u32 %v583, 4
    %v585 = vand.u32 %v583, 15
    %v586 = vsub.s32 0, %v585
    %v587 = vsel %vm581, %v586, %v585
    %vm588 = vcmp.lt.s32.totalorder %v572, 0
    %v589 = vsub.s32 0, %v572
    %v590 = vsel %vm588, %v589, %v572
    %v591 = vshrl.u32 %v590, 4
    %v592 = vand.u32 %v590, 15
    %v593 = vsub.s32 0, %v592
    %v594 = vsel %vm588, %v593, %v592
    %vm595 = vcmp.lt.s32.totalorder %v573, 0
    %v596 = vsub.s32 0, %v573
    %v597 = vsel %vm595, %v596, %v573
    %v598 = vshrl.u32 %v597, 4
    %v599 = vand.u32 %v597, 15
    %v600 = vsub.s32 0, %v599
    %v601 = vsel %vm595, %v600, %v599
    %vm602 = vcmp.ne.s32.totalorder %v580, 0
    %vm603 = vcmp.ne.s32.totalorder %v587, 0
    %vm604 = vcmp.ne.s32.totalorder %v594, 0
    %vm605 = vcmp.ne.s32.totalorder %v601, 0
    %vm606 = vcmp.lt.s32.totalorder %v580, 0
    %vm607 = vcmp.lt.s32.totalorder %v587, 0
    %vm608 = vcmp.lt.s32.totalorder %v594, 0
    %vm609 = vcmp.lt.s32.totalorder %v601, 0
    %vm610 = vmand %vm606, %vm602
    %vm611 = vmand %vm607, %vm603
    %vm612 = vmand %vm608, %vm604
    %vm613 = vmand %vm609, %vm605
    %v614 = vadd.s32 %v580, 16
    %v615 = vadd.s32 %v587, 16
    %v616 = vadd.s32 %v594, 16
    %v617 = vadd.s32 %v601, 16
    %v618 = vsel %vm610, %v614, %v580
    %v619 = vsel %vm611, %v615, %v587
    %v620 = vsel %vm612, %v616, %v594
    %v621 = vsel %vm613, %v617, %v601
    %v622 = vrot.slane %v555, 6
    %v623 = vrot.slane %v558, 6
    %v624 = vrot.slane %v563, 6
    %v625 = vrot.slane %v566, 6
    %vm626 = vcmp.lt.s32.totalorder %v570, 2
    %v627 = vsel %vm626, %v624, %v625
    %v628 = vsel %vm626, %v623, %v624
    %v629 = vsel %vm626, %v622, %v623
    %v630 = vsel %vm626, %v625, %v622
    %v631 = vadd.s32 %v618, 4294967294
    %v632 = vadd.s32 %v619, 4294967294
    %v633 = vadd.s32 %v620, 4294967294
    %v634 = vadd.s32 %v621, 4294967294
    %vm635 = vcmp.ge.s32.totalorder %v631, 0
    %vm636 = vcmp.ge.s32.totalorder %v632, 0
    %vm637 = vcmp.ge.s32.totalorder %v633, 0
    %vm638 = vcmp.ge.s32.totalorder %v634, 0
    %vm639 = vcmp.lt.s32.totalorder %v631, 16
    %vm640 = vcmp.lt.s32.totalorder %v632, 16
    %vm641 = vcmp.lt.s32.totalorder %v633, 16
    %vm642 = vcmp.lt.s32.totalorder %v634, 16
    %vm643 = vmand %vm635, %vm639
    %vm644 = vmand %vm636, %vm640
    %vm645 = vmand %vm637, %vm641
    %vm646 = vmand %vm638, %vm642
    %v647 = vsel %vm643, %v630, 0.0
    %v648 = vsel %vm644, %v629, 0.0
    %v649 = vsel %vm645, %v628, 0.0
    %v650 = vsel %vm646, %v627, 0.0
    %v651 = vrot.slane %v555, 7
    %v652 = vrot.slane %v558, 7
    %v653 = vrot.slane %v563, 7
    %v654 = vrot.slane %v566, 7
    %vm655 = vcmp.lt.s32.totalorder %v570, 1
    %v656 = vsel %vm655, %v653, %v654
    %v657 = vsel %vm655, %v652, %v653
    %v658 = vsel %vm655, %v651, %v652
    %v659 = vsel %vm655, %v654, %v651
    %v660 = vadd.s32 %v618, 4294967295
    %v661 = vadd.s32 %v619, 4294967295
    %v662 = vadd.s32 %v620, 4294967295
    %v663 = vadd.s32 %v621, 4294967295
    %vm664 = vcmp.ge.s32.totalorder %v660, 0
    %vm665 = vcmp.ge.s32.totalorder %v661, 0
    %vm666 = vcmp.ge.s32.totalorder %v662, 0
    %vm667 = vcmp.ge.s32.totalorder %v663, 0
    %vm668 = vcmp.lt.s32.totalorder %v660, 16
    %vm669 = vcmp.lt.s32.totalorder %v661, 16
    %vm670 = vcmp.lt.s32.totalorder %v662, 16
    %vm671 = vcmp.lt.s32.totalorder %v663, 16
    %vm672 = vmand %vm664, %vm668
    %vm673 = vmand %vm665, %vm669
    %vm674 = vmand %vm666, %vm670
    %vm675 = vmand %vm667, %vm671
    %v676 = vsel %vm672, %v659, 0.0
    %v677 = vsel %vm673, %v658, 0.0
    %v678 = vsel %vm674, %v657, 0.0
    %v679 = vsel %vm675, %v656, 0.0
    %v680 = vrot.slane %v555, 1
    %v681 = vrot.slane %v558, 1
    %v682 = vrot.slane %v563, 1
    %v683 = vrot.slane %v566, 1
    %vm684 = vcmp.lt.s32.totalorder %v570, 7
    %v685 = vsel %vm684, %v682, %v683
    %v686 = vsel %vm684, %v681, %v682
    %v687 = vsel %vm684, %v680, %v681
    %v688 = vsel %vm684, %v683, %v680
    %v689 = vadd.s32 %v618, 1
    %v690 = vadd.s32 %v619, 1
    %v691 = vadd.s32 %v620, 1
    %v692 = vadd.s32 %v621, 1
    %vm693 = vcmp.ge.s32.totalorder %v689, 0
    %vm694 = vcmp.ge.s32.totalorder %v690, 0
    %vm695 = vcmp.ge.s32.totalorder %v691, 0
    %vm696 = vcmp.ge.s32.totalorder %v692, 0
    %vm697 = vcmp.lt.s32.totalorder %v689, 16
    %vm698 = vcmp.lt.s32.totalorder %v690, 16
    %vm699 = vcmp.lt.s32.totalorder %v691, 16
    %vm700 = vcmp.lt.s32.totalorder %v692, 16
    %vm701 = vmand %vm693, %vm697
    %vm702 = vmand %vm694, %vm698
    %vm703 = vmand %vm695, %vm699
    %vm704 = vmand %vm696, %vm700
    %v705 = vsel %vm701, %v687, 0.0
    %v706 = vsel %vm702, %v686, 0.0
    %v707 = vsel %vm703, %v685, 0.0
    %v708 = vsel %vm704, %v688, 0.0
    %v709 = vrot.slane %v555, 2
    %v710 = vrot.slane %v558, 2
    %v711 = vrot.slane %v563, 2
    %v712 = vrot.slane %v566, 2
    %vm713 = vcmp.lt.s32.totalorder %v570, 6
    %v714 = vsel %vm713, %v711, %v712
    %v715 = vsel %vm713, %v710, %v711
    %v716 = vsel %vm713, %v709, %v710
    %v717 = vsel %vm713, %v712, %v709
    %v718 = vadd.s32 %v618, 2
    %v719 = vadd.s32 %v619, 2
    %v720 = vadd.s32 %v620, 2
    %v721 = vadd.s32 %v621, 2
    %vm722 = vcmp.ge.s32.totalorder %v718, 0
    %vm723 = vcmp.ge.s32.totalorder %v719, 0
    %vm724 = vcmp.ge.s32.totalorder %v720, 0
    %vm725 = vcmp.ge.s32.totalorder %v721, 0
    %vm726 = vcmp.lt.s32.totalorder %v718, 16
    %vm727 = vcmp.lt.s32.totalorder %v719, 16
    %vm728 = vcmp.lt.s32.totalorder %v720, 16
    %vm729 = vcmp.lt.s32.totalorder %v721, 16
    %vm730 = vmand %vm722, %vm726
    %vm731 = vmand %vm723, %vm727
    %vm732 = vmand %vm724, %vm728
    %vm733 = vmand %vm725, %vm729
    %v734 = vsel %vm730, %v716, 0.0
    %v735 = vsel %vm731, %v715, 0.0
    %v736 = vsel %vm732, %v714, 0.0
    %v737 = vsel %vm733, %v717, 0.0
    %v738 = vpack.c.bf16 %v648, %v647
    %v739 = vpack.c.bf16 %v677, %v676
    %v740 = vpack.c.bf16 %v558, %v555
    %v741 = vpack.c.bf16 %v706, %v705
    %v742 = vpack.c.bf16 %v735, %v734
    %v743 = vpack.c.bf16 %v650, %v649
    %v744 = vpack.c.bf16 %v679, %v678
    %v745 = vpack.c.bf16 %v566, %v563
    %v746 = vpack.c.bf16 %v708, %v707
    %v747 = vpack.c.bf16 %v737, %v736
    %v748 = vld [vmem:[#allocation8] sm:$0xf]
    %v749 = vld [vmem:[#allocation8 + $0x4] sm:$0xf]
    %v750 = vld [vmem:[#allocation8 + $0x8] sm:$0xf]
    %v751 = vld [vmem:[#allocation8 + $0xc] sm:$0xf]
    %v752 = vld [vmem:[#allocation8 + $0x10] sm:$0xf]
    %v753 = vld [vmem:[#allocation8 + $0x14] sm:$0xf]
    %v754 = vld [vmem:[#allocation8 + $0x18] sm:$0xf]
    %v755 = vld [vmem:[#allocation8 + $0x1c] sm:$0xf]
    %v756 = vld [vmem:[#allocation8 + $0x20] sm:$0xf]
    %v757 = vld [vmem:[#allocation8 + $0x24] sm:$0xf]
    %v758 = vld [vmem:[#allocation8 + $0x28] sm:$0xf]
    %v759 = vld [vmem:[#allocation8 + $0x2c] sm:$0xf]
    %v760 = vld [vmem:[#allocation8 + $0x30] sm:$0xf]
    %v761 = vld [vmem:[#allocation8 + $0x34] sm:$0xf]
    %v762 = vld [vmem:[#allocation8 + $0x38] sm:$0xf]
    %v763 = vld [vmem:[#allocation8 + $0x3c] sm:$0xf]
    %v764 = vld [vmem:[#allocation8 + $0x40] sm:$0xf]
    %v765 = vld [vmem:[#allocation8 + $0x44] sm:$0xf]
    %v766 = vld [vmem:[#allocation8 + $0x48] sm:$0xf]
    %v767 = vld [vmem:[#allocation8 + $0x4c] sm:$0xf]
    %v768 = vld [vmem:[#allocation8 + $0x50] sm:$0xf]
    %v769 = vld [vmem:[#allocation8 + $0x54] sm:$0xf]
    %v770 = vld [vmem:[#allocation8 + $0x58] sm:$0xf]
    %v771 = vld [vmem:[#allocation8 + $0x5c] sm:$0xf]
    %v772 = vld [vmem:[#allocation8 + $0x60] sm:$0xf]
    %v773 = vld [vmem:[#allocation8 + $0x64] sm:$0xf]
    %v774 = vld [vmem:[#allocation8 + $0x68] sm:$0xf]
    %v775 = vld [vmem:[#allocation8 + $0x6c] sm:$0xf]
    %v776 = vld [vmem:[#allocation8 + $0x70] sm:$0xf]
    %v777 = vld [vmem:[#allocation8 + $0x74] sm:$0xf]
    %v778 = vld [vmem:[#allocation8 + $0x78] sm:$0xf]
    %v779 = vld [vmem:[#allocation8 + $0x7c] sm:$0xf]
    %v780 = vld [vmem:[#allocation8 + $0x80] sm:$0xf]
    %v781 = vld [vmem:[#allocation8 + $0x84] sm:$0xf]
    %v782 = vld [vmem:[#allocation8 + $0x88] sm:$0xf]
    %v783 = vld [vmem:[#allocation8 + $0x8c] sm:$0xf]
    %v784 = vld [vmem:[#allocation8 + $0x90] sm:$0xf]
    %v785 = vld [vmem:[#allocation8 + $0x94] sm:$0xf]
    %v786 = vld [vmem:[#allocation8 + $0x98] sm:$0xf]
    %v787 = vld [vmem:[#allocation8 + $0x9c] sm:$0xf]
    %v788 = vld [vmem:[#allocation8 + $0xa0] sm:$0xf]
    %v789 = vld [vmem:[#allocation8 + $0xa4] sm:$0xf]
    %v790 = vld [vmem:[#allocation8 + $0xa8] sm:$0xf]
    %v791 = vld [vmem:[#allocation8 + $0xac] sm:$0xf]
    %v792 = vld [vmem:[#allocation8 + $0xb0] sm:$0xf]
    %v793 = vld [vmem:[#allocation8 + $0xb4] sm:$0xf]
    %v794 = vld [vmem:[#allocation8 + $0xb8] sm:$0xf]
    %v795 = vld [vmem:[#allocation8 + $0xbc] sm:$0xf]
    %v796 = vld [vmem:[#allocation8 + $0xc0] sm:$0xf]
    %v797 = vld [vmem:[#allocation8 + $0xc4] sm:$0xf]
    %v798 = vld [vmem:[#allocation8 + $0xc8] sm:$0xf]
    %v799 = vld [vmem:[#allocation8 + $0xcc] sm:$0xf]
    %v800 = vld [vmem:[#allocation8 + $0xd0] sm:$0xf]
    %v801 = vld [vmem:[#allocation8 + $0xd4] sm:$0xf]
    %v802 = vld [vmem:[#allocation8 + $0xd8] sm:$0xf]
    %v803 = vld [vmem:[#allocation8 + $0xdc] sm:$0xf]
    %v804 = vld [vmem:[#allocation8 + $0xe0] sm:$0xf]
    %v805 = vld [vmem:[#allocation8 + $0xe4] sm:$0xf]
    %v806 = vld [vmem:[#allocation8 + $0xe8] sm:$0xf]
    %v807 = vld [vmem:[#allocation8 + $0xec] sm:$0xf]
    %v808 = vld [vmem:[#allocation8 + $0xf0] sm:$0xf]
    %v809 = vld [vmem:[#allocation8 + $0xf4] sm:$0xf]
    %v810 = vld [vmem:[#allocation8 + $0xf8] sm:$0xf]
    %v811 = vld [vmem:[#allocation8 + $0xfc] sm:$0xf]
    %v812 = vld [vmem:[#allocation8 + $0x100] sm:$0xf]
    %v813 = vld [vmem:[#allocation8 + $0x104] sm:$0xf]
    %v814 = vld [vmem:[#allocation8 + $0x108] sm:$0xf]
    %v815 = vld [vmem:[#allocation8 + $0x10c] sm:$0xf]
    %v816 = vld [vmem:[#allocation8 + $0x110] sm:$0xf]
    %v817 = vld [vmem:[#allocation8 + $0x114] sm:$0xf]
    %v818 = vld [vmem:[#allocation8 + $0x118] sm:$0xf]
    %v819 = vld [vmem:[#allocation8 + $0x11c] sm:$0xf]
    %v820 = vld [vmem:[#allocation8 + $0x120] sm:$0xf]
    %v821 = vld [vmem:[#allocation8 + $0x124] sm:$0xf]
    %v822 = vld [vmem:[#allocation8 + $0x128] sm:$0xf]
    %v823 = vld [vmem:[#allocation8 + $0x12c] sm:$0xf]
    %v824 = vld [vmem:[#allocation8 + $0x130] sm:$0xf]
    %v825 = vld [vmem:[#allocation8 + $0x134] sm:$0xf]
    %v826 = vld [vmem:[#allocation8 + $0x138] sm:$0xf]
    %v827 = vld [vmem:[#allocation8 + $0x13c] sm:$0xf]
    %v828 = vld [vmem:[%s6] sm:$0x1]
    %v830 = vlaneseq
    %v831 = vshrl.u32 %v830, 7
    %v832 = vsub.s32 0, %v831
    %v833 = vrot.slane %v828, %v832
    %v915 = vunpack.c.l.b16 %v748
    %v916 = vunpack.c.l.b16 %v749
    %v917 = vunpack.c.l.b16 %v750
    %v918 = vunpack.c.l.b16 %v751
    %v919 = vunpack.c.l.b16 %v752
    %v920 = vunpack.c.l.b16 %v753
    %v921 = vunpack.c.l.b16 %v754
    %v922 = vunpack.c.l.b16 %v755
    %v923 = vunpack.c.l.b16 %v756
    %v924 = vunpack.c.l.b16 %v757
    %v925 = vunpack.c.l.b16 %v758
    %v926 = vunpack.c.l.b16 %v759
    %v927 = vunpack.c.l.b16 %v760
    %v928 = vunpack.c.l.b16 %v761
    %v929 = vunpack.c.l.b16 %v762
    %v930 = vunpack.c.l.b16 %v763
    %v931 = vunpack.c.l.b16 %v764
    %v932 = vunpack.c.l.b16 %v765
    %v933 = vunpack.c.l.b16 %v766
    %v934 = vunpack.c.l.b16 %v767
    %v935 = vunpack.c.l.b16 %v768
    %v936 = vunpack.c.l.b16 %v769
    %v937 = vunpack.c.l.b16 %v770
    %v938 = vunpack.c.l.b16 %v771
    %v939 = vunpack.c.l.b16 %v772
    %v940 = vunpack.c.l.b16 %v773
    %v941 = vunpack.c.l.b16 %v774
    %v942 = vunpack.c.l.b16 %v775
    %v943 = vunpack.c.l.b16 %v776
    %v944 = vunpack.c.l.b16 %v777
    %v945 = vunpack.c.l.b16 %v778
    %v946 = vunpack.c.l.b16 %v779
    %v947 = vunpack.c.l.b16 %v780
    %v948 = vunpack.c.l.b16 %v781
    %v949 = vunpack.c.l.b16 %v782
    %v950 = vunpack.c.l.b16 %v783
    %v951 = vunpack.c.l.b16 %v784
    %v952 = vunpack.c.l.b16 %v785
    %v953 = vunpack.c.l.b16 %v786
    %v954 = vunpack.c.l.b16 %v787
    %v955 = vunpack.c.l.b16 %v788
    %v956 = vunpack.c.l.b16 %v789
    %v957 = vunpack.c.l.b16 %v790
    %v958 = vunpack.c.l.b16 %v791
    %v959 = vunpack.c.l.b16 %v792
    %v960 = vunpack.c.l.b16 %v793
    %v961 = vunpack.c.l.b16 %v794
    %v962 = vunpack.c.l.b16 %v795
    %v963 = vunpack.c.l.b16 %v796
    %v964 = vunpack.c.l.b16 %v797
    %v965 = vunpack.c.l.b16 %v798
    %v966 = vunpack.c.l.b16 %v799
    %v967 = vunpack.c.l.b16 %v800
    %v968 = vunpack.c.l.b16 %v801
    %v969 = vunpack.c.l.b16 %v802
    %v970 = vunpack.c.l.b16 %v803
    %v971 = vunpack.c.l.b16 %v804
    %v972 = vunpack.c.l.b16 %v805
    %v973 = vunpack.c.l.b16 %v806
    %v974 = vunpack.c.l.b16 %v807
    %v975 = vunpack.c.l.b16 %v808
    %v976 = vunpack.c.l.b16 %v809
    %v977 = vunpack.c.l.b16 %v810
    %v978 = vunpack.c.l.b16 %v811
    %v979 = vunpack.c.l.b16 %v812
    %v980 = vunpack.c.l.b16 %v813
    %v981 = vunpack.c.l.b16 %v814
    %v982 = vunpack.c.l.b16 %v815
    %v983 = vunpack.c.l.b16 %v816
    %v984 = vunpack.c.l.b16 %v817
    %v985 = vunpack.c.l.b16 %v818
    %v986 = vunpack.c.l.b16 %v819
    %v987 = vunpack.c.l.b16 %v820
    %v988 = vunpack.c.l.b16 %v821
    %v989 = vunpack.c.l.b16 %v822
    %v990 = vunpack.c.l.b16 %v823
    %v991 = vunpack.c.l.b16 %v824
    %v992 = vunpack.c.l.b16 %v825
    %v993 = vunpack.c.l.b16 %v826
    %v994 = vunpack.c.l.b16 %v827
    %v995 = vpack.c.b16 %v916, %v915
    %v996 = vpack.c.b16 %v918, %v917
    %v997 = vpack.c.b16 %v920, %v919
    %v998 = vpack.c.b16 %v922, %v921
    %v999 = vpack.c.b16 %v924, %v923
    %v1000 = vpack.c.b16 %v926, %v925
    %v1001 = vpack.c.b16 %v928, %v927
    %v1002 = vpack.c.b16 %v930, %v929
    %v1003 = vpack.c.b16 %v932, %v931
    %v1004 = vpack.c.b16 %v934, %v933
    %v1005 = vpack.c.b16 %v936, %v935
    %v1006 = vpack.c.b16 %v938, %v937
    %v1007 = vpack.c.b16 %v940, %v939
    %v1008 = vpack.c.b16 %v942, %v941
    %v1009 = vpack.c.b16 %v944, %v943
    %v1010 = vpack.c.b16 %v946, %v945
    %v1011 = vpack.c.b16 %v948, %v947
    %v1012 = vpack.c.b16 %v950, %v949
    %v1013 = vpack.c.b16 %v952, %v951
    %v1014 = vpack.c.b16 %v954, %v953
    %v1015 = vpack.c.b16 %v956, %v955
    %v1016 = vpack.c.b16 %v958, %v957
    %v1017 = vpack.c.b16 %v960, %v959
    %v1018 = vpack.c.b16 %v962, %v961
    %v1019 = vpack.c.b16 %v964, %v963
    %v1020 = vpack.c.b16 %v966, %v965
    %v1021 = vpack.c.b16 %v968, %v967
    %v1022 = vpack.c.b16 %v970, %v969
    %v1023 = vpack.c.b16 %v972, %v971
    %v1024 = vpack.c.b16 %v974, %v973
    %v1025 = vpack.c.b16 %v976, %v975
    %v1026 = vpack.c.b16 %v978, %v977
    %v1027 = vpack.c.b16 %v980, %v979
    %v1028 = vpack.c.b16 %v982, %v981
    %v1029 = vpack.c.b16 %v984, %v983
    %v1030 = vpack.c.b16 %v986, %v985
    %v1031 = vpack.c.b16 %v988, %v987
    %v1032 = vpack.c.b16 %v990, %v989
    %v1033 = vpack.c.b16 %v992, %v991
    %v1034 = vpack.c.b16 %v994, %v993
    %1075 = vmatprep.subr.bf16.mxu0 0
    %1076 = vmatpush1.bf16.msra.mxu0 %v995
    %1077 = vmatprep.subr.bf16.mxu0 0
    %1078 = vmatpush1.bf16.msra.mxu0 %v996
    %1079 = vmatprep.subr.bf16.mxu0 0
    %1080 = vmatpush1.bf16.msra.mxu0 %v997
    %1081 = vmatprep.subr.bf16.mxu0 0
    %1082 = vmatpush1.bf16.msra.mxu0 %v998
    %1083 = vmatprep.subr.bf16.mxu0 0
    %1084 = vmatpush1.bf16.msra.mxu0 %v999
    %1085 = vmatprep.subr.bf16.mxu0 0
    %1086 = vmatpush1.bf16.msra.mxu0 %v1000
    %1087 = vmatprep.subr.bf16.mxu0 0
    %1088 = vmatpush1.bf16.msra.mxu0 %v1001
    %1089 = vmatprep.subr.bf16.mxu0 0
    %1090 = vmatpush1.bf16.msra.mxu0 %v1002
    %1091 = vmatprep.subr.bf16.mxu0 0
    %1092 = vmatpush1.bf16.msra.mxu0 %v1003
    %1093 = vmatprep.subr.bf16.mxu0 0
    %1094 = vmatpush1.bf16.msra.mxu0 %v1004
    %1095 = vmatprep.subr.bf16.mxu0 0
    %1096 = vmatpush1.bf16.msra.mxu0 %v1005
    %1097 = vmatprep.subr.bf16.mxu0 0
    %1098 = vmatpush1.bf16.msra.mxu0 %v1006
    %1099 = vmatprep.subr.bf16.mxu0 0
    %1100 = vmatpush1.bf16.msra.mxu0 %v1007
    %1101 = vmatprep.subr.bf16.mxu0 0
    %1102 = vmatpush1.bf16.msra.mxu0 %v1008
    %1103 = vmatprep.subr.bf16.mxu0 0
    %1104 = vmatpush1.bf16.msra.mxu0 %v1009
    %1105 = vmatprep.subr.bf16.mxu0 0
    %1106 = vmatpush1.bf16.msra.mxu0 %v1010
    %1107 = vmatprep.mubr.bf16.mxu0 %v739
    %1108 = vmatmul.mubr.bf16.gmra.mrb[0].mxu0 %v738
    %v1109 = vpop.f32.mrb[0].mxu0
    %v1110 = vadd.f32 %v833, %v1109
    %v1111 = vpop.f32.mrb[0].mxu0
    %v1112 = vpop.f32.mrb[0].mxu0
    %v1113 = vadd.f32 %v833, %v1112
    %v1114 = vpop.f32.mrb[0].mxu0
    %1115 = vmatprep.mubr.bf16.mxu0 %v744
    %1116 = vmatmul.mubr.bf16.gmra.mrb[0].mxu0 %v743
    %v1117 = vpop.f32.mrb[0].mxu0
    %v1118 = vadd.f32 %v833, %v1117
    %v1119 = vpop.f32.mrb[0].mxu0
    %v1120 = vpop.f32.mrb[0].mxu0
    %v1121 = vadd.f32 %v833, %v1120
    %v1122 = vpop.f32.mrb[0].mxu0
    %1123 = vdwg.mxu0
    %1124 = vmatprep.subr.bf16.mxu0 0
    %1125 = vmatpush1.bf16.msra.mxu0 %v1011
    %1126 = vmatprep.subr.bf16.mxu0 0
    %1127 = vmatpush1.bf16.msra.mxu0 %v1012
    %1128 = vmatprep.subr.bf16.mxu0 0
    %1129 = vmatpush1.bf16.msra.mxu0 %v1013
    %1130 = vmatprep.subr.bf16.mxu0 0
    %1131 = vmatpush1.bf16.msra.mxu0 %v1014
    %1132 = vmatprep.subr.bf16.mxu0 0
    %1133 = vmatpush1.bf16.msra.mxu0 %v1015
    %1134 = vmatprep.subr.bf16.mxu0 0
    %1135 = vmatpush1.bf16.msra.mxu0 %v1016
    %1136 = vmatprep.subr.bf16.mxu0 0
    %1137 = vmatpush1.bf16.msra.mxu0 %v1017
    %1138 = vmatprep.subr.bf16.mxu0 0
    %1139 = vmatpush1.bf16.msra.mxu0 %v1018
    %1140 = vmatprep.subr.bf16.mxu0 0
    %1141 = vmatpush1.bf16.msra.mxu0 %v1019
    %1142 = vmatprep.subr.bf16.mxu0 0
    %1143 = vmatpush1.bf16.msra.mxu0 %v1020
    %1144 = vmatprep.subr.bf16.mxu0 0
    %1145 = vmatpush1.bf16.msra.mxu0 %v1021
    %1146 = vmatprep.subr.bf16.mxu0 0
    %1147 = vmatpush1.bf16.msra.mxu0 %v1022
    %1148 = vmatprep.subr.bf16.mxu0 0
    %1149 = vmatpush1.bf16.msra.mxu0 %v1023
    %1150 = vmatprep.subr.bf16.mxu0 0
    %1151 = vmatpush1.bf16.msra.mxu0 %v1024
    %1152 = vmatprep.subr.bf16.mxu0 0
    %1153 = vmatpush1.bf16.msra.mxu0 %v1025
    %1154 = vmatprep.subr.bf16.mxu0 0
    %1155 = vmatpush1.bf16.msra.mxu0 %v1026
    %1156 = vmatprep.mubr.bf16.mxu0 %v741
    %1157 = vmatmul.mubr.bf16.gmra.mrb[0].mxu0 %v740
    %v1158 = vpop.f32.mrb[0].mxu0
    %v1159 = vadd.f32 %v1110, %v1158
    %v1160 = vpop.f32.mrb[0].mxu0
    %v1161 = vpop.f32.mrb[0].mxu0
    %v1162 = vadd.f32 %v1113, %v1161
    %v1163 = vpop.f32.mrb[0].mxu0
    %1164 = vmatprep.mubr.bf16.mxu0 %v746
    %1165 = vmatmul.mubr.bf16.gmra.mrb[0].mxu0 %v745
    %v1166 = vpop.f32.mrb[0].mxu0
    %v1167 = vadd.f32 %v1118, %v1166
    %v1168 = vpop.f32.mrb[0].mxu0
    %v1169 = vpop.f32.mrb[0].mxu0
    %v1170 = vadd.f32 %v1121, %v1169
    %v1171 = vpop.f32.mrb[0].mxu0
    %1172 = vdwg.mxu0
    %1173 = vmatprep.subr.bf16.mxu0 0
    %1174 = vmatpush1.bf16.msra.mxu0 %v1027
    %1175 = vmatprep.subr.bf16.mxu0 0
    %1176 = vmatpush1.bf16.msra.mxu0 %v1028
    %1177 = vmatprep.subr.bf16.mxu0 0
    %1178 = vmatpush1.bf16.msra.mxu0 %v1029
    %1179 = vmatprep.subr.bf16.mxu0 0
    %1180 = vmatpush1.bf16.msra.mxu0 %v1030
    %1181 = vmatprep.subr.bf16.mxu0 0
    %1182 = vmatpush1.bf16.msra.mxu0 %v1031
    %1183 = vmatprep.subr.bf16.mxu0 0
    %1184 = vmatpush1.bf16.msra.mxu0 %v1032
    %1185 = vmatprep.subr.bf16.mxu0 0
    %1186 = vmatpush1.bf16.msra.mxu0 %v1033
    %1187 = vmatprep.subr.bf16.mxu0 0
    %1188 = vmatpush1.bf16.msra.mxu0 %v1034
    %1189 = vmatprep.subr.bf16.mxu0 0
    %1190 = vmatpush1.bf16.msra.mxu0 0
    %1191 = vmatprep.subr.bf16.mxu0 0
    %1192 = vmatpush1.bf16.msra.mxu0 0
    %1193 = vmatprep.subr.bf16.mxu0 0
    %1194 = vmatpush1.bf16.msra.mxu0 0
    %1195 = vmatprep.subr.bf16.mxu0 0
    %1196 = vmatpush1.bf16.msra.mxu0 0
    %1197 = vmatprep.subr.bf16.mxu0 0
    %1198 = vmatpush1.bf16.msra.mxu0 0
    %1199 = vmatprep.subr.bf16.mxu0 0
    %1200 = vmatpush1.bf16.msra.mxu0 0
    %1201 = vmatprep.subr.bf16.mxu0 0
    %1202 = vmatpush1.bf16.msra.mxu0 0
    %1203 = vmatprep.subr.bf16.mxu0 0
    %1204 = vmatpush1.bf16.msra.mxu0 0
    %1205 = vmatprep.mubr.bf16.mxu0 0
    %1206 = vmatmul.mubr.bf16.gmra.mrb[0].mxu0 %v742
    %v1207 = vpop.f32.mrb[0].mxu0
    %v1208 = vadd.f32 %v1159, %v1207
    %v1209 = vpop.f32.mrb[0].mxu0
    %v1210 = vpop.f32.mrb[0].mxu0
    %v1211 = vadd.f32 %v1162, %v1210
    %v1212 = vpop.f32.mrb[0].mxu0
    %1213 = vmatprep.mubr.bf16.mxu0 0
    %1214 = vmatmul.mubr.bf16.gmra.mrb[0].mxu0 %v747
    %v1215 = vpop.f32.mrb[0].mxu0
    %v1216 = vadd.f32 %v1167, %v1215
    %v1217 = vpop.f32.mrb[0].mxu0
    %v1218 = vpop.f32.mrb[0].mxu0
    %v1219 = vadd.f32 %v1170, %v1218
    %v1220 = vpop.f32.mrb[0].mxu0
    %1221 = vdwg.mxu0
    %v1222 = vrot.slane %v1208, 7
    %v1223 = vrot.slane %v1211, 7
    %v1224 = vrot.slane %v1216, 7
    %v1225 = vrot.slane %v1219, 7
    %v1226 = vsel %vm655, %v1224, %v1225
    %v1227 = vsel %vm655, %v1223, %v1224
    %v1228 = vsel %vm655, %v1222, %v1223
    %v1229 = vsel %vm655, %v1225, %v1222
    %v1230 = vadd.s32 %v618, 4294967287
    %v1231 = vadd.s32 %v619, 4294967287
    %v1232 = vadd.s32 %v620, 4294967287
    %v1233 = vadd.s32 %v621, 4294967287
    %vm1234 = vcmp.ge.s32.totalorder %v1230, 0
    %vm1235 = vcmp.ge.s32.totalorder %v1231, 0
    %vm1236 = vcmp.ge.s32.totalorder %v1232, 0
    %vm1237 = vcmp.ge.s32.totalorder %v1233, 0
    %vm1238 = vcmp.lt.s32.totalorder %v1230, 16
    %vm1239 = vcmp.lt.s32.totalorder %v1231, 16
    %vm1240 = vcmp.lt.s32.totalorder %v1232, 16
    %vm1241 = vcmp.lt.s32.totalorder %v1233, 16
    %vm1242 = vmand %vm1234, %vm1238
    %vm1243 = vmand %vm1235, %vm1239
    %vm1244 = vmand %vm1236, %vm1240
    %vm1245 = vmand %vm1237, %vm1241
    %v1246 = vsel %vm1242, %v1226, 0.0
    %v1247 = vsel %vm1243, %v1229, 0.0
    %v1248 = vsel %vm1244, %v1228, 0.0
    %v1249 = vsel %vm1245, %v1227, 0.0
    %v1250 = vrot.slane %v1208, 2
    %v1251 = vrot.slane %v1211, 2
    %v1252 = vrot.slane %v1216, 2
    %v1253 = vrot.slane %v1219, 2
    %v1254 = vsel %vm713, %v1252, %v1253
    %v1255 = vsel %vm713, %v1251, %v1252
    %v1256 = vsel %vm713, %v1250, %v1251
    %v1257 = vsel %vm713, %v1253, %v1250
    %v1258 = vadd.s32 %v618, 4294967290
    %v1259 = vadd.s32 %v619, 4294967290
    %v1260 = vadd.s32 %v620, 4294967290
    %v1261 = vadd.s32 %v621, 4294967290
    %vm1262 = vcmp.ge.s32.totalorder %v1258, 0
    %vm1263 = vcmp.ge.s32.totalorder %v1259, 0
    %vm1264 = vcmp.ge.s32.totalorder %v1260, 0
    %vm1265 = vcmp.ge.s32.totalorder %v1261, 0
    %vm1266 = vcmp.lt.s32.totalorder %v1258, 16
    %vm1267 = vcmp.lt.s32.totalorder %v1259, 16
    %vm1268 = vcmp.lt.s32.totalorder %v1260, 16
    %vm1269 = vcmp.lt.s32.totalorder %v1261, 16
    %vm1270 = vmand %vm1262, %vm1266
    %vm1271 = vmand %vm1263, %vm1267
    %vm1272 = vmand %vm1264, %vm1268
    %vm1273 = vmand %vm1265, %vm1269
    %v1274 = vsel %vm1270, %v1257, 0.0
    %v1275 = vsel %vm1271, %v1256, 0.0
    %v1276 = vsel %vm1272, %v1255, 0.0
    %v1277 = vsel %vm1273, %v1254, 0.0
    %v1278 = vrot.slane %v1208, 5
    %v1279 = vrot.slane %v1211, 5
    %v1280 = vrot.slane %v1216, 5
    %v1281 = vrot.slane %v1219, 5
    %vm1282 = vcmp.lt.s32.totalorder %v570, 3
    %v1283 = vsel %vm1282, %v1280, %v1281
    %v1284 = vsel %vm1282, %v1279, %v1280
    %v1285 = vsel %vm1282, %v1278, %v1279
    %v1286 = vsel %vm1282, %v1281, %v1278
    %v1287 = vadd.s32 %v618, 4294967293
    %v1288 = vadd.s32 %v619, 4294967293
    %v1289 = vadd.s32 %v620, 4294967293
    %v1290 = vadd.s32 %v621, 4294967293
    %vm1291 = vcmp.ge.s32.totalorder %v1287, 0
    %vm1292 = vcmp.ge.s32.totalorder %v1288, 0
    %vm1293 = vcmp.ge.s32.totalorder %v1289, 0
    %vm1294 = vcmp.ge.s32.totalorder %v1290, 0
    %vm1295 = vcmp.lt.s32.totalorder %v1287, 16
    %vm1296 = vcmp.lt.s32.totalorder %v1288, 16
    %vm1297 = vcmp.lt.s32.totalorder %v1289, 16
    %vm1298 = vcmp.lt.s32.totalorder %v1290, 16
    %vm1299 = vmand %vm1291, %vm1295
    %vm1300 = vmand %vm1292, %vm1296
    %vm1301 = vmand %vm1293, %vm1297
    %vm1302 = vmand %vm1294, %vm1298
    %v1303 = vsel %vm1299, %v1286, 0.0
    %v1304 = vsel %vm1300, %v1285, 0.0
    %v1305 = vsel %vm1301, %v1284, 0.0
    %v1306 = vsel %vm1302, %v1283, 0.0
    %v1307 = vrot.slane %v1208, 3
    %v1308 = vrot.slane %v1211, 3
    %v1309 = vrot.slane %v1216, 3
    %v1310 = vrot.slane %v1219, 3
    %vm1311 = vcmp.lt.s32.totalorder %v570, 5
    %v1312 = vsel %vm1311, %v1309, %v1310
    %v1313 = vsel %vm1311, %v1308, %v1309
    %v1314 = vsel %vm1311, %v1307, %v1308
    %v1315 = vsel %vm1311, %v1310, %v1307
    %v1316 = vadd.s32 %v618, 3
    %v1317 = vadd.s32 %v619, 3
    %v1318 = vadd.s32 %v620, 3
    %v1319 = vadd.s32 %v621, 3
    %vm1320 = vcmp.ge.s32.totalorder %v1316, 0
    %vm1321 = vcmp.ge.s32.totalorder %v1317, 0
    %vm1322 = vcmp.ge.s32.totalorder %v1318, 0
    %vm1323 = vcmp.ge.s32.totalorder %v1319, 0
    %vm1324 = vcmp.lt.s32.totalorder %v1316, 16
    %vm1325 = vcmp.lt.s32.totalorder %v1317, 16
    %vm1326 = vcmp.lt.s32.totalorder %v1318, 16
    %vm1327 = vcmp.lt.s32.totalorder %v1319, 16
    %vm1328 = vmand %vm1320, %vm1324
    %vm1329 = vmand %vm1321, %vm1325
    %vm1330 = vmand %vm1322, %vm1326
    %vm1331 = vmand %vm1323, %vm1327
    %v1332 = vsel %vm1328, %v1314, 0.0
    %v1333 = vsel %vm1329, %v1313, 0.0
    %v1334 = vsel %vm1330, %v1312, 0.0
    %v1335 = vsel %vm1331, %v1315, 0.0
    %v1336 = vrot.slane %v1208, 6
    %v1337 = vrot.slane %v1211, 6
    %v1338 = vrot.slane %v1216, 6
    %v1339 = vrot.slane %v1219, 6
    %v1340 = vsel %vm626, %v1338, %v1339
    %v1341 = vsel %vm626, %v1337, %v1338
    %v1342 = vsel %vm626, %v1336, %v1337
    %v1343 = vsel %vm626, %v1339, %v1336
    %v1344 = vadd.s32 %v618, 6
    %v1345 = vadd.s32 %v619, 6
    %v1346 = vadd.s32 %v620, 6
    %v1347 = vadd.s32 %v621, 6
    %vm1348 = vcmp.ge.s32.totalorder %v1344, 0
    %vm1349 = vcmp.ge.s32.totalorder %v1345, 0
    %vm1350 = vcmp.ge.s32.totalorder %v1346, 0
    %vm1351 = vcmp.ge.s32.totalorder %v1347, 0
    %vm1352 = vcmp.lt.s32.totalorder %v1344, 16
    %vm1353 = vcmp.lt.s32.totalorder %v1345, 16
    %vm1354 = vcmp.lt.s32.totalorder %v1346, 16
    %vm1355 = vcmp.lt.s32.totalorder %v1347, 16
    %vm1356 = vmand %vm1348, %vm1352
    %vm1357 = vmand %vm1349, %vm1353
    %vm1358 = vmand %vm1350, %vm1354
    %vm1359 = vmand %vm1351, %vm1355
    %v1360 = vsel %vm1356, %v1342, 0.0
    %v1361 = vsel %vm1357, %v1341, 0.0
    %v1362 = vsel %vm1358, %v1340, 0.0
    %v1363 = vsel %vm1359, %v1343, 0.0
    %v1364 = vrot.slane %v1208, 1
    %v1365 = vrot.slane %v1211, 1
    %v1366 = vrot.slane %v1216, 1
    %v1367 = vrot.slane %v1219, 1
    %v1368 = vsel %vm684, %v1366, %v1367
    %v1369 = vsel %vm684, %v1365, %v1366
    %v1370 = vsel %vm684, %v1364, %v1365
    %v1371 = vsel %vm684, %v1367, %v1364
    %v1372 = vadd.s32 %v618, 9
    %v1373 = vadd.s32 %v619, 9
    %v1374 = vadd.s32 %v620, 9
    %v1375 = vadd.s32 %v621, 9
    %vm1376 = vcmp.ge.s32.totalorder %v1372, 0
    %vm1377 = vcmp.ge.s32.totalorder %v1373, 0
    %vm1378 = vcmp.ge.s32.totalorder %v1374, 0
    %vm1379 = vcmp.ge.s32.totalorder %v1375, 0
    %vm1380 = vcmp.lt.s32.totalorder %v1372, 16
    %vm1381 = vcmp.lt.s32.totalorder %v1373, 16
    %vm1382 = vcmp.lt.s32.totalorder %v1374, 16
    %vm1383 = vcmp.lt.s32.totalorder %v1375, 16
    %vm1384 = vmand %vm1376, %vm1380
    %vm1385 = vmand %vm1377, %vm1381
    %vm1386 = vmand %vm1378, %vm1382
    %vm1387 = vmand %vm1379, %vm1383
    %v1388 = vsel %vm1384, %v1369, 0.0
    %v1389 = vsel %vm1385, %v1368, 0.0
    %v1390 = vsel %vm1386, %v1371, 0.0
    %v1391 = vsel %vm1387, %v1370, 0.0
    %v1392 = vpack.c.bf16 %v1247, %v1246
    %v1393 = vpack.c.bf16 %v1275, %v1274
    %v1394 = vpack.c.bf16 %v1304, %v1303
    %v1395 = vpack.c.bf16 %v1211, %v1208
    %v1396 = vpack.c.bf16 %v1333, %v1332
    %v1397 = vpack.c.bf16 %v1361, %v1360
    %v1398 = vpack.c.bf16 %v1389, %v1388
    %v1399 = vpack.c.bf16 %v1249, %v1248
    %v1400 = vpack.c.bf16 %v1277, %v1276
    %v1401 = vpack.c.bf16 %v1306, %v1305
    %v1402 = vpack.c.bf16 %v1219, %v1216
    %v1403 = vpack.c.bf16 %v1335, %v1334
    %v1404 = vpack.c.bf16 %v1363, %v1362
    %v1405 = vpack.c.bf16 %v1391, %v1390
    %v1406 = vld [vmem:[#allocation10] sm:$0xf]
    %v1407 = vld [vmem:[#allocation10 + $0x4] sm:$0xf]
    %v1408 = vld [vmem:[#allocation10 + $0x8] sm:$0xf]
    %v1409 = vld [vmem:[#allocation10 + $0xc] sm:$0xf]
    %v1410 = vld [vmem:[#allocation10 + $0x10] sm:$0xf]
    %v1411 = vld [vmem:[#allocation10 + $0x14] sm:$0xf]
    %v1412 = vld [vmem:[#allocation10 + $0x18] sm:$0xf]
    %v1413 = vld [vmem:[#allocation10 + $0x1c] sm:$0xf]
    %v1414 = vld [vmem:[#allocation10 + $0x20] sm:$0xf]
    %v1415 = vld [vmem:[#allocation10 + $0x24] sm:$0xf]
    %v1416 = vld [vmem:[#allocation10 + $0x28] sm:$0xf]
    %v1417 = vld [vmem:[#allocation10 + $0x2c] sm:$0xf]
    %v1418 = vld [vmem:[#allocation10 + $0x30] sm:$0xf]
    %v1419 = vld [vmem:[#allocation10 + $0x34] sm:$0xf]
    %v1420 = vld [vmem:[#allocation10 + $0x38] sm:$0xf]
    %v1421 = vld [vmem:[#allocation10 + $0x3c] sm:$0xf]
    %v1422 = vld [vmem:[#allocation10 + $0x40] sm:$0xf]
    %v1423 = vld [vmem:[#allocation10 + $0x44] sm:$0xf]
    %v1424 = vld [vmem:[#allocation10 + $0x48] sm:$0xf]
    %v1425 = vld [vmem:[#allocation10 + $0x4c] sm:$0xf]
    %v1426 = vld [vmem:[#allocation10 + $0x50] sm:$0xf]
    %v1427 = vld [vmem:[#allocation10 + $0x54] sm:$0xf]
    %v1428 = vld [vmem:[#allocation10 + $0x58] sm:$0xf]
    %v1429 = vld [vmem:[#allocation10 + $0x5c] sm:$0xf]
    %v1430 = vld [vmem:[#allocation10 + $0x60] sm:$0xf]
    %v1431 = vld [vmem:[#allocation10 + $0x64] sm:$0xf]
    %v1432 = vld [vmem:[#allocation10 + $0x68] sm:$0xf]
    %v1433 = vld [vmem:[#allocation10 + $0x6c] sm:$0xf]
    %v1434 = vld [vmem:[#allocation10 + $0x70] sm:$0xf]
    %v1435 = vld [vmem:[#allocation10 + $0x74] sm:$0xf]
    %v1436 = vld [vmem:[#allocation10 + $0x78] sm:$0xf]
    %v1437 = vld [vmem:[#allocation10 + $0x7c] sm:$0xf]
    %v1438 = vld [vmem:[#allocation10 + $0x80] sm:$0xf]
    %v1439 = vld [vmem:[#allocation10 + $0x84] sm:$0xf]
    %v1440 = vld [vmem:[#allocation10 + $0x88] sm:$0xf]
    %v1441 = vld [vmem:[#allocation10 + $0x8c] sm:$0xf]
    %v1442 = vld [vmem:[#allocation10 + $0x90] sm:$0xf]
    %v1443 = vld [vmem:[#allocation10 + $0x94] sm:$0xf]
    %v1444 = vld [vmem:[#allocation10 + $0x98] sm:$0xf]
    %v1445 = vld [vmem:[#allocation10 + $0x9c] sm:$0xf]
    %v1446 = vld [vmem:[#allocation10 + $0xa0] sm:$0xf]
    %v1447 = vld [vmem:[#allocation10 + $0xa4] sm:$0xf]
    %v1448 = vld [vmem:[#allocation10 + $0xa8] sm:$0xf]
    %v1449 = vld [vmem:[#allocation10 + $0xac] sm:$0xf]
    %v1450 = vld [vmem:[#allocation10 + $0xb0] sm:$0xf]
    %v1451 = vld [vmem:[#allocation10 + $0xb4] sm:$0xf]
    %v1452 = vld [vmem:[#allocation10 + $0xb8] sm:$0xf]
    %v1453 = vld [vmem:[#allocation10 + $0xbc] sm:$0xf]
    %v1454 = vld [vmem:[#allocation10 + $0xc0] sm:$0xf]
    %v1455 = vld [vmem:[#allocation10 + $0xc4] sm:$0xf]
    %v1456 = vld [vmem:[#allocation10 + $0xc8] sm:$0xf]
    %v1457 = vld [vmem:[#allocation10 + $0xcc] sm:$0xf]
    %v1458 = vld [vmem:[#allocation10 + $0xd0] sm:$0xf]
    %v1459 = vld [vmem:[#allocation10 + $0xd4] sm:$0xf]
    %v1460 = vld [vmem:[#allocation10 + $0xd8] sm:$0xf]
    %v1461 = vld [vmem:[#allocation10 + $0xdc] sm:$0xf]
    %v1462 = vld [vmem:[#allocation10 + $0xe0] sm:$0xf]
    %v1463 = vld [vmem:[#allocation10 + $0xe4] sm:$0xf]
    %v1464 = vld [vmem:[#allocation10 + $0xe8] sm:$0xf]
    %v1465 = vld [vmem:[#allocation10 + $0xec] sm:$0xf]
    %v1466 = vld [vmem:[#allocation10 + $0xf0] sm:$0xf]
    %v1467 = vld [vmem:[#allocation10 + $0xf4] sm:$0xf]
    %v1468 = vld [vmem:[#allocation10 + $0xf8] sm:$0xf]
    %v1469 = vld [vmem:[#allocation10 + $0xfc] sm:$0xf]
    %v1470 = vld [vmem:[#allocation10 + $0x100] sm:$0xf]
    %v1471 = vld [vmem:[#allocation10 + $0x104] sm:$0xf]
    %v1472 = vld [vmem:[#allocation10 + $0x108] sm:$0xf]
    %v1473 = vld [vmem:[#allocation10 + $0x10c] sm:$0xf]
    %v1474 = vld [vmem:[#allocation10 + $0x110] sm:$0xf]
    %v1475 = vld [vmem:[#allocation10 + $0x114] sm:$0xf]
    %v1476 = vld [vmem:[#allocation10 + $0x118] sm:$0xf]
    %v1477 = vld [vmem:[#allocation10 + $0x11c] sm:$0xf]
    %v1478 = vld [vmem:[#allocation10 + $0x120] sm:$0xf]
    %v1479 = vld [vmem:[#allocation10 + $0x124] sm:$0xf]
    %v1480 = vld [vmem:[#allocation10 + $0x128] sm:$0xf]
    %v1481 = vld [vmem:[#allocation10 + $0x12c] sm:$0xf]
    %v1482 = vld [vmem:[#allocation10 + $0x130] sm:$0xf]
    %v1483 = vld [vmem:[#allocation10 + $0x134] sm:$0xf]
    %v1484 = vld [vmem:[#allocation10 + $0x138] sm:$0xf]
    %v1485 = vld [vmem:[#allocation10 + $0x13c] sm:$0xf]
    %v1486 = vld [vmem:[#allocation10 + $0x140] sm:$0xf]
    %v1487 = vld [vmem:[#allocation10 + $0x144] sm:$0xf]
    %v1488 = vld [vmem:[#allocation10 + $0x148] sm:$0xf]
    %v1489 = vld [vmem:[#allocation10 + $0x14c] sm:$0xf]
    %v1490 = vld [vmem:[#allocation10 + $0x150] sm:$0xf]
    %v1491 = vld [vmem:[#allocation10 + $0x154] sm:$0xf]
    %v1492 = vld [vmem:[#allocation10 + $0x158] sm:$0xf]
    %v1493 = vld [vmem:[#allocation10 + $0x15c] sm:$0xf]
    %v1494 = vld [vmem:[#allocation10 + $0x160] sm:$0xf]
    %v1495 = vld [vmem:[#allocation10 + $0x164] sm:$0xf]
    %v1496 = vld [vmem:[#allocation10 + $0x168] sm:$0xf]
    %v1497 = vld [vmem:[#allocation10 + $0x16c] sm:$0xf]
    %v1498 = vld [vmem:[#allocation10 + $0x170] sm:$0xf]
    %v1499 = vld [vmem:[#allocation10 + $0x174] sm:$0xf]
    %v1500 = vld [vmem:[#allocation10 + $0x178] sm:$0xf]
    %v1501 = vld [vmem:[#allocation10 + $0x17c] sm:$0xf]
    %v1502 = vld [vmem:[#allocation10 + $0x180] sm:$0xf]
    %v1503 = vld [vmem:[#allocation10 + $0x184] sm:$0xf]
    %v1504 = vld [vmem:[#allocation10 + $0x188] sm:$0xf]
    %v1505 = vld [vmem:[#allocation10 + $0x18c] sm:$0xf]
    %v1506 = vld [vmem:[#allocation10 + $0x190] sm:$0xf]
    %v1507 = vld [vmem:[#allocation10 + $0x194] sm:$0xf]
    %v1508 = vld [vmem:[#allocation10 + $0x198] sm:$0xf]
    %v1509 = vld [vmem:[#allocation10 + $0x19c] sm:$0xf]
    %v1510 = vld [vmem:[#allocation10 + $0x1a0] sm:$0xf]
    %v1511 = vld [vmem:[#allocation10 + $0x1a4] sm:$0xf]
    %v1512 = vld [vmem:[#allocation10 + $0x1a8] sm:$0xf]
    %v1513 = vld [vmem:[#allocation10 + $0x1ac] sm:$0xf]
    %v1514 = vld [vmem:[#allocation10 + $0x1b0] sm:$0xf]
    %v1515 = vld [vmem:[#allocation10 + $0x1b4] sm:$0xf]
    %v1516 = vld [vmem:[#allocation10 + $0x1b8] sm:$0xf]
    %v1517 = vld [vmem:[#allocation10 + $0x1bc] sm:$0xf]
    %v1518 = vld [vmem:[%s8] sm:$0x1]
    %v1520 = vlaneseq
    %v1521 = vshrl.u32 %v1520, 7
    %v1522 = vsub.s32 0, %v1521
    %v1523 = vrot.slane %v1518, %v1522
    %v1637 = vunpack.c.l.b16 %v1406
    %v1638 = vunpack.c.l.b16 %v1407
    %v1639 = vunpack.c.l.b16 %v1408
    %v1640 = vunpack.c.l.b16 %v1409
    %v1641 = vunpack.c.l.b16 %v1410
    %v1642 = vunpack.c.l.b16 %v1411
    %v1643 = vunpack.c.l.b16 %v1412
    %v1644 = vunpack.c.l.b16 %v1413
    %v1645 = vunpack.c.l.b16 %v1414
    %v1646 = vunpack.c.l.b16 %v1415
    %v1647 = vunpack.c.l.b16 %v1416
    %v1648 = vunpack.c.l.b16 %v1417
    %v1649 = vunpack.c.l.b16 %v1418
    %v1650 = vunpack.c.l.b16 %v1419
    %v1651 = vunpack.c.l.b16 %v1420
    %v1652 = vunpack.c.l.b16 %v1421
    %v1653 = vunpack.c.l.b16 %v1422
    %v1654 = vunpack.c.l.b16 %v1423
    %v1655 = vunpack.c.l.b16 %v1424
    %v1656 = vunpack.c.l.b16 %v1425
    %v1657 = vunpack.c.l.b16 %v1426
    %v1658 = vunpack.c.l.b16 %v1427
    %v1659 = vunpack.c.l.b16 %v1428
    %v1660 = vunpack.c.l.b16 %v1429
    %v1661 = vunpack.c.l.b16 %v1430
    %v1662 = vunpack.c.l.b16 %v1431
    %v1663 = vunpack.c.l.b16 %v1432
    %v1664 = vunpack.c.l.b16 %v1433
    %v1665 = vunpack.c.l.b16 %v1434
    %v1666 = vunpack.c.l.b16 %v1435
    %v1667 = vunpack.c.l.b16 %v1436
    %v1668 = vunpack.c.l.b16 %v1437
    %v1669 = vunpack.c.l.b16 %v1438
    %v1670 = vunpack.c.l.b16 %v1439
    %v1671 = vunpack.c.l.b16 %v1440
    %v1672 = vunpack.c.l.b16 %v1441
    %v1673 = vunpack.c.l.b16 %v1442
    %v1674 = vunpack.c.l.b16 %v1443
    %v1675 = vunpack.c.l.b16 %v1444
    %v1676 = vunpack.c.l.b16 %v1445
    %v1677 = vunpack.c.l.b16 %v1446
    %v1678 = vunpack.c.l.b16 %v1447
    %v1679 = vunpack.c.l.b16 %v1448
    %v1680 = vunpack.c.l.b16 %v1449
    %v1681 = vunpack.c.l.b16 %v1450
    %v1682 = vunpack.c.l.b16 %v1451
    %v1683 = vunpack.c.l.b16 %v1452
    %v1684 = vunpack.c.l.b16 %v1453
    %v1685 = vunpack.c.l.b16 %v1454
    %v1686 = vunpack.c.l.b16 %v1455
    %v1687 = vunpack.c.l.b16 %v1456
    %v1688 = vunpack.c.l.b16 %v1457
    %v1689 = vunpack.c.l.b16 %v1458
    %v1690 = vunpack.c.l.b16 %v1459
    %v1691 = vunpack.c.l.b16 %v1460
    %v1692 = vunpack.c.l.b16 %v1461
    %v1693 = vunpack.c.l.b16 %v1462
    %v1694 = vunpack.c.l.b16 %v1463
    %v1695 = vunpack.c.l.b16 %v1464
    %v1696 = vunpack.c.l.b16 %v1465
    %v1697 = vunpack.c.l.b16 %v1466
    %v1698 = vunpack.c.l.b16 %v1467
    %v1699 = vunpack.c.l.b16 %v1468
    %v1700 = vunpack.c.l.b16 %v1469
    %v1701 = vunpack.c.l.b16 %v1470
    %v1702 = vunpack.c.l.b16 %v1471
    %v1703 = vunpack.c.l.b16 %v1472
    %v1704 = vunpack.c.l.b16 %v1473
    %v1705 = vunpack.c.l.b16 %v1474
    %v1706 = vunpack.c.l.b16 %v1475
    %v1707 = vunpack.c.l.b16 %v1476
    %v1708 = vunpack.c.l.b16 %v1477
    %v1709 = vunpack.c.l.b16 %v1478
    %v1710 = vunpack.c.l.b16 %v1479
    %v1711 = vunpack.c.l.b16 %v1480
    %v1712 = vunpack.c.l.b16 %v1481
    %v1713 = vunpack.c.l.b16 %v1482
    %v1714 = vunpack.c.l.b16 %v1483
    %v1715 = vunpack.c.l.b16 %v1484
    %v1716 = vunpack.c.l.b16 %v1485
    %v1717 = vunpack.c.l.b16 %v1486
    %v1718 = vunpack.c.l.b16 %v1487
    %v1719 = vunpack.c.l.b16 %v1488
    %v1720 = vunpack.c.l.b16 %v1489
    %v1721 = vunpack.c.l.b16 %v1490
    %v1722 = vunpack.c.l.b16 %v1491
    %v1723 = vunpack.c.l.b16 %v1492
    %v1724 = vunpack.c.l.b16 %v1493
    %v1725 = vunpack.c.l.b16 %v1494
    %v1726 = vunpack.c.l.b16 %v1495
    %v1727 = vunpack.c.l.b16 %v1496
    %v1728 = vunpack.c.l.b16 %v1497
    %v1729 = vunpack.c.l.b16 %v1498
    %v1730 = vunpack.c.l.b16 %v1499
    %v1731 = vunpack.c.l.b16 %v1500
    %v1732 = vunpack.c.l.b16 %v1501
    %v1733 = vunpack.c.l.b16 %v1502
    %v1734 = vunpack.c.l.b16 %v1503
    %v1735 = vunpack.c.l.b16 %v1504
    %v1736 = vunpack.c.l.b16 %v1505
    %v1737 = vunpack.c.l.b16 %v1506
    %v1738 = vunpack.c.l.b16 %v1507
    %v1739 = vunpack.c.l.b16 %v1508
    %v1740 = vunpack.c.l.b16 %v1509
    %v1741 = vunpack.c.l.b16 %v1510
    %v1742 = vunpack.c.l.b16 %v1511
    %v1743 = vunpack.c.l.b16 %v1512
    %v1744 = vunpack.c.l.b16 %v1513
    %v1745 = vunpack.c.l.b16 %v1514
    %v1746 = vunpack.c.l.b16 %v1515
    %v1747 = vunpack.c.l.b16 %v1516
    %v1748 = vunpack.c.l.b16 %v1517
    %v1749 = vpack.c.b16 %v1638, %v1637
    %v1750 = vpack.c.b16 %v1640, %v1639
    %v1751 = vpack.c.b16 %v1642, %v1641
    %v1752 = vpack.c.b16 %v1644, %v1643
    %v1753 = vpack.c.b16 %v1646, %v1645
    %v1754 = vpack.c.b16 %v1648, %v1647
    %v1755 = vpack.c.b16 %v1650, %v1649
    %v1756 = vpack.c.b16 %v1652, %v1651
    %v1757 = vpack.c.b16 %v1654, %v1653
    %v1758 = vpack.c.b16 %v1656, %v1655
    %v1759 = vpack.c.b16 %v1658, %v1657
    %v1760 = vpack.c.b16 %v1660, %v1659
    %v1761 = vpack.c.b16 %v1662, %v1661
    %v1762 = vpack.c.b16 %v1664, %v1663
    %v1763 = vpack.c.b16 %v1666, %v1665
    %v1764 = vpack.c.b16 %v1668, %v1667
    %v1765 = vpack.c.b16 %v1670, %v1669
    %v1766 = vpack.c.b16 %v1672, %v1671
    %v1767 = vpack.c.b16 %v1674, %v1673
    %v1768 = vpack.c.b16 %v1676, %v1675
    %v1769 = vpack.c.b16 %v1678, %v1677
    %v1770 = vpack.c.b16 %v1680, %v1679
    %v1771 = vpack.c.b16 %v1682, %v1681
    %v1772 = vpack.c.b16 %v1684, %v1683
    %v1773 = vpack.c.b16 %v1686, %v1685
    %v1774 = vpack.c.b16 %v1688, %v1687
    %v1775 = vpack.c.b16 %v1690, %v1689
    %v1776 = vpack.c.b16 %v1692, %v1691
    %v1777 = vpack.c.b16 %v1694, %v1693
    %v1778 = vpack.c.b16 %v1696, %v1695
    %v1779 = vpack.c.b16 %v1698, %v1697
    %v1780 = vpack.c.b16 %v1700, %v1699
    %v1781 = vpack.c.b16 %v1702, %v1701
    %v1782 = vpack.c.b16 %v1704, %v1703
    %v1783 = vpack.c.b16 %v1706, %v1705
    %v1784 = vpack.c.b16 %v1708, %v1707
    %v1785 = vpack.c.b16 %v1710, %v1709
    %v1786 = vpack.c.b16 %v1712, %v1711
    %v1787 = vpack.c.b16 %v1714, %v1713
    %v1788 = vpack.c.b16 %v1716, %v1715
    %v1789 = vpack.c.b16 %v1718, %v1717
    %v1790 = vpack.c.b16 %v1720, %v1719
    %v1791 = vpack.c.b16 %v1722, %v1721
    %v1792 = vpack.c.b16 %v1724, %v1723
    %v1793 = vpack.c.b16 %v1726, %v1725
    %v1794 = vpack.c.b16 %v1728, %v1727
    %v1795 = vpack.c.b16 %v1730, %v1729
    %v1796 = vpack.c.b16 %v1732, %v1731
    %v1797 = vpack.c.b16 %v1734, %v1733
    %v1798 = vpack.c.b16 %v1736, %v1735
    %v1799 = vpack.c.b16 %v1738, %v1737
    %v1800 = vpack.c.b16 %v1740, %v1739
    %v1801 = vpack.c.b16 %v1742, %v1741
    %v1802 = vpack.c.b16 %v1744, %v1743
    %v1803 = vpack.c.b16 %v1746, %v1745
    %v1804 = vpack.c.b16 %v1748, %v1747
    %1861 = vmatprep.subr.bf16.mxu0 0
    %1862 = vmatpush1.bf16.msra.mxu0 %v1749
    %1863 = vmatprep.subr.bf16.mxu0 0
    %1864 = vmatpush1.bf16.msra.mxu0 %v1750
    %1865 = vmatprep.subr.bf16.mxu0 0
    %1866 = vmatpush1.bf16.msra.mxu0 %v1751
    %1867 = vmatprep.subr.bf16.mxu0 0
    %1868 = vmatpush1.bf16.msra.mxu0 %v1752
    %1869 = vmatprep.subr.bf16.mxu0 0
    %1870 = vmatpush1.bf16.msra.mxu0 %v1753
    %1871 = vmatprep.subr.bf16.mxu0 0
    %1872 = vmatpush1.bf16.msra.mxu0 %v1754
    %1873 = vmatprep.subr.bf16.mxu0 0
    %1874 = vmatpush1.bf16.msra.mxu0 %v1755
    %1875 = vmatprep.subr.bf16.mxu0 0
    %1876 = vmatpush1.bf16.msra.mxu0 %v1756
    %1877 = vmatprep.subr.bf16.mxu0 0
    %1878 = vmatpush1.bf16.msra.mxu0 %v1757
    %1879 = vmatprep.subr.bf16.mxu0 0
    %1880 = vmatpush1.bf16.msra.mxu0 %v1758
    %1881 = vmatprep.subr.bf16.mxu0 0
    %1882 = vmatpush1.bf16.msra.mxu0 %v1759
    %1883 = vmatprep.subr.bf16.mxu0 0
    %1884 = vmatpush1.bf16.msra.mxu0 %v1760
    %1885 = vmatprep.subr.bf16.mxu0 0
    %1886 = vmatpush1.bf16.msra.mxu0 %v1761
    %1887 = vmatprep.subr.bf16.mxu0 0
    %1888 = vmatpush1.bf16.msra.mxu0 %v1762
    %1889 = vmatprep.subr.bf16.mxu0 0
    %1890 = vmatpush1.bf16.msra.mxu0 %v1763
    %1891 = vmatprep.subr.bf16.mxu0 0
    %1892 = vmatpush1.bf16.msra.mxu0 %v1764
    %1893 = vmatprep.mubr.bf16.mxu0 %v1393
    %1894 = vmatmul.mubr.bf16.gmra.mrb[0].mxu0 %v1392
    %v1895 = vpop.f32.mrb[0].mxu0
    %v1896 = vadd.f32 %v1523, %v1895
    %v1897 = vpop.f32.mrb[0].mxu0
    %v1898 = vpop.f32.mrb[0].mxu0
    %v1899 = vadd.f32 %v1523, %v1898
    %v1900 = vpop.f32.mrb[0].mxu0
    %1901 = vmatprep.mubr.bf16.mxu0 %v1400
    %1902 = vmatmul.mubr.bf16.gmra.mrb[0].mxu0 %v1399
    %v1903 = vpop.f32.mrb[0].mxu0
    %v1904 = vadd.f32 %v1523, %v1903
    %v1905 = vpop.f32.mrb[0].mxu0
    %v1906 = vpop.f32.mrb[0].mxu0
    %v1907 = vadd.f32 %v1523, %v1906
    %v1908 = vpop.f32.mrb[0].mxu0
    %1909 = vdwg.mxu0
    %1910 = vmatprep.subr.bf16.mxu0 0
    %1911 = vmatpush1.bf16.msra.mxu0 %v1765
    %1912 = vmatprep.subr.bf16.mxu0 0
    %1913 = vmatpush1.bf16.msra.mxu0 %v1766
    %1914 = vmatprep.subr.bf16.mxu0 0
    %1915 = vmatpush1.bf16.msra.mxu0 %v1767
    %1916 = vmatprep.subr.bf16.mxu0 0
    %1917 = vmatpush1.bf16.msra.mxu0 %v1768
    %1918 = vmatprep.subr.bf16.mxu0 0
    %1919 = vmatpush1.bf16.msra.mxu0 %v1769
    %1920 = vmatprep.subr.bf16.mxu0 0
    %1921 = vmatpush1.bf16.msra.mxu0 %v1770
    %1922 = vmatprep.subr.bf16.mxu0 0
    %1923 = vmatpush1.bf16.msra.mxu0 %v1771
    %1924 = vmatprep.subr.bf16.mxu0 0
    %1925 = vmatpush1.bf16.msra.mxu0 %v1772
    %1926 = vmatprep.subr.bf16.mxu0 0
    %1927 = vmatpush1.bf16.msra.mxu0 %v1773
    %1928 = vmatprep.subr.bf16.mxu0 0
    %1929 = vmatpush1.bf16.msra.mxu0 %v1774
    %1930 = vmatprep.subr.bf16.mxu0 0
    %1931 = vmatpush1.bf16.msra.mxu0 %v1775
    %1932 = vmatprep.subr.bf16.mxu0 0
    %1933 = vmatpush1.bf16.msra.mxu0 %v1776
    %1934 = vmatprep.subr.bf16.mxu0 0
    %1935 = vmatpush1.bf16.msra.mxu0 %v1777
    %1936 = vmatprep.subr.bf16.mxu0 0
    %1937 = vmatpush1.bf16.msra.mxu0 %v1778
    %1938 = vmatprep.subr.bf16.mxu0 0
    %1939 = vmatpush1.bf16.msra.mxu0 %v1779
    %1940 = vmatprep.subr.bf16.mxu0 0
    %1941 = vmatpush1.bf16.msra.mxu0 %v1780
    %1942 = vmatprep.mubr.bf16.mxu0 %v1395
    %1943 = vmatmul.mubr.bf16.gmra.mrb[0].mxu0 %v1394
    %v1944 = vpop.f32.mrb[0].mxu0
    %v1945 = vadd.f32 %v1896, %v1944
    %v1946 = vpop.f32.mrb[0].mxu0
    %v1947 = vpop.f32.mrb[0].mxu0
    %v1948 = vadd.f32 %v1899, %v1947
    %v1949 = vpop.f32.mrb[0].mxu0
    %1950 = vmatprep.mubr.bf16.mxu0 %v1402
    %1951 = vmatmul.mubr.bf16.gmra.mrb[0].mxu0 %v1401
    %v1952 = vpop.f32.mrb[0].mxu0
    %v1953 = vadd.f32 %v1904, %v1952
    %v1954 = vpop.f32.mrb[0].mxu0
    %v1955 = vpop.f32.mrb[0].mxu0
    %v1956 = vadd.f32 %v1907, %v1955
    %v1957 = vpop.f32.mrb[0].mxu0
    %1958 = vdwg.mxu0
    %1959 = vmatprep.subr.bf16.mxu0 0
    %1960 = vmatpush1.bf16.msra.mxu0 %v1781
    %1961 = vmatprep.subr.bf16.mxu0 0
    %1962 = vmatpush1.bf16.msra.mxu0 %v1782
    %1963 = vmatprep.subr.bf16.mxu0 0
    %1964 = vmatpush1.bf16.msra.mxu0 %v1783
    %1965 = vmatprep.subr.bf16.mxu0 0
    %1966 = vmatpush1.bf16.msra.mxu0 %v1784
    %1967 = vmatprep.subr.bf16.mxu0 0
    %1968 = vmatpush1.bf16.msra.mxu0 %v1785
    %1969 = vmatprep.subr.bf16.mxu0 0
    %1970 = vmatpush1.bf16.msra.mxu0 %v1786
    %1971 = vmatprep.subr.bf16.mxu0 0
    %1972 = vmatpush1.bf16.msra.mxu0 %v1787
    %1973 = vmatprep.subr.bf16.mxu0 0
    %1974 = vmatpush1.bf16.msra.mxu0 %v1788
    %1975 = vmatprep.subr.bf16.mxu0 0
    %1976 = vmatpush1.bf16.msra.mxu0 %v1789
    %1977 = vmatprep.subr.bf16.mxu0 0
    %1978 = vmatpush1.bf16.msra.mxu0 %v1790
    %1979 = vmatprep.subr.bf16.mxu0 0
    %1980 = vmatpush1.bf16.msra.mxu0 %v1791
    %1981 = vmatprep.subr.bf16.mxu0 0
    %1982 = vmatpush1.bf16.msra.mxu0 %v1792
    %1983 = vmatprep.subr.bf16.mxu0 0
    %1984 = vmatpush1.bf16.msra.mxu0 %v1793
    %1985 = vmatprep.subr.bf16.mxu0 0
    %1986 = vmatpush1.bf16.msra.mxu0 %v1794
    %1987 = vmatprep.subr.bf16.mxu0 0
    %1988 = vmatpush1.bf16.msra.mxu0 %v1795
    %1989 = vmatprep.subr.bf16.mxu0 0
    %1990 = vmatpush1.bf16.msra.mxu0 %v1796
    %1991 = vmatprep.mubr.bf16.mxu0 %v1397
    %1992 = vmatmul.mubr.bf16.gmra.mrb[0].mxu0 %v1396
    %v1993 = vpop.f32.mrb[0].mxu0
    %v1994 = vadd.f32 %v1945, %v1993
    %v1995 = vpop.f32.mrb[0].mxu0
    %v1996 = vpop.f32.mrb[0].mxu0
    %v1997 = vadd.f32 %v1948, %v1996
    %v1998 = vpop.f32.mrb[0].mxu0
    %1999 = vmatprep.mubr.bf16.mxu0 %v1404
    %2000 = vmatmul.mubr.bf16.gmra.mrb[0].mxu0 %v1403
    %v2001 = vpop.f32.mrb[0].mxu0
    %v2002 = vadd.f32 %v1953, %v2001
    %v2003 = vpop.f32.mrb[0].mxu0
    %v2004 = vpop.f32.mrb[0].mxu0
    %v2005 = vadd.f32 %v1956, %v2004
    %v2006 = vpop.f32.mrb[0].mxu0
    %2007 = vdwg.mxu0
    %2008 = vmatprep.subr.bf16.mxu0 0
    %2009 = vmatpush1.bf16.msra.mxu0 %v1797
    %2010 = vmatprep.subr.bf16.mxu0 0
    %2011 = vmatpush1.bf16.msra.mxu0 %v1798
    %2012 = vmatprep.subr.bf16.mxu0 0
    %2013 = vmatpush1.bf16.msra.mxu0 %v1799
    %2014 = vmatprep.subr.bf16.mxu0 0
    %2015 = vmatpush1.bf16.msra.mxu0 %v1800
    %2016 = vmatprep.subr.bf16.mxu0 0
    %2017 = vmatpush1.bf16.msra.mxu0 %v1801
    %2018 = vmatprep.subr.bf16.mxu0 0
    %2019 = vmatpush1.bf16.msra.mxu0 %v1802
    %2020 = vmatprep.subr.bf16.mxu0 0
    %2021 = vmatpush1.bf16.msra.mxu0 %v1803
    %2022 = vmatprep.subr.bf16.mxu0 0
    %2023 = vmatpush1.bf16.msra.mxu0 %v1804
    %2024 = vmatprep.subr.bf16.mxu0 0
    %2025 = vmatpush1.bf16.msra.mxu0 0
    %2026 = vmatprep.subr.bf16.mxu0 0
    %2027 = vmatpush1.bf16.msra.mxu0 0
    %2028 = vmatprep.subr.bf16.mxu0 0
    %2029 = vmatpush1.bf16.msra.mxu0 0
    %2030 = vmatprep.subr.bf16.mxu0 0
    %2031 = vmatpush1.bf16.msra.mxu0 0
    %2032 = vmatprep.subr.bf16.mxu0 0
    %2033 = vmatpush1.bf16.msra.mxu0 0
    %2034 = vmatprep.subr.bf16.mxu0 0
    %2035 = vmatpush1.bf16.msra.mxu0 0
    %2036 = vmatprep.subr.bf16.mxu0 0
    %2037 = vmatpush1.bf16.msra.mxu0 0
    %2038 = vmatprep.subr.bf16.mxu0 0
    %2039 = vmatpush1.bf16.msra.mxu0 0
    %2040 = vmatprep.mubr.bf16.mxu0 0
    %2041 = vmatmul.mubr.bf16.gmra.mrb[0].mxu0 %v1398
    %v2042 = vpop.f32.mrb[0].mxu0
    %v2043 = vadd.f32 %v1994, %v2042
    %v2044 = vpop.f32.mrb[0].mxu0
    %v2045 = vpop.f32.mrb[0].mxu0
    %v2046 = vadd.f32 %v1997, %v2045
    %v2047 = vpop.f32.mrb[0].mxu0
    %2048 = vmatprep.mubr.bf16.mxu0 0
    %2049 = vmatmul.mubr.bf16.gmra.mrb[0].mxu0 %v1405
    %v2050 = vpop.f32.mrb[0].mxu0
    %v2051 = vadd.f32 %v2002, %v2050
    %v2052 = vpop.f32.mrb[0].mxu0
    %v2053 = vpop.f32.mrb[0].mxu0
    %v2054 = vadd.f32 %v2005, %v2053
    %v2055 = vpop.f32.mrb[0].mxu0
    %2056 = vdwg.mxu0
    %v2057 = vpack.c.bf16 %v2046, %v2043
    %v2058 = vpack.c.bf16 %v2054, %v2051
    %v2059 = vld [vmem:[#allocation11] sm:$0xf]
    %v2060 = vld [vmem:[#allocation11 + $0x4] sm:$0xf]
    %v2061 = vld [vmem:[#allocation11 + $0x8] sm:$0xf]
    %v2062 = vld [vmem:[#allocation11 + $0xc] sm:$0xf]
    %v2063 = vld [vmem:[#allocation11 + $0x10] sm:$0xf]
    %v2064 = vld [vmem:[#allocation11 + $0x14] sm:$0xf]
    %v2065 = vld [vmem:[#allocation11 + $0x18] sm:$0xf]
    %v2066 = vld [vmem:[#allocation11 + $0x1c] sm:$0xf]
    %v2067 = vld [vmem:[#allocation11 + $0x20] sm:$0xf]
    %v2068 = vld [vmem:[#allocation11 + $0x24] sm:$0xf]
    %v2069 = vld [vmem:[#allocation11 + $0x28] sm:$0xf]
    %v2070 = vld [vmem:[#allocation11 + $0x2c] sm:$0xf]
    %v2071 = vld [vmem:[#allocation11 + $0x30] sm:$0xf]
    %v2072 = vld [vmem:[#allocation11 + $0x34] sm:$0xf]
    %v2073 = vld [vmem:[#allocation11 + $0x38] sm:$0xf]
    %v2074 = vld [vmem:[#allocation11 + $0x3c] sm:$0xf]
    %v2075 = vld [vmem:[%s10] sm:$0x1]
    %v2077 = vlaneseq
    %v2078 = vshrl.u32 %v2077, 7
    %v2079 = vsub.s32 0, %v2078
    %v2080 = vrot.slane %v2075, %v2079
    %v2098 = vunpack.c.l.b16 %v2059
    %v2099 = vunpack.c.l.b16 %v2060
    %v2100 = vunpack.c.l.b16 %v2061
    %v2101 = vunpack.c.l.b16 %v2062
    %v2102 = vunpack.c.l.b16 %v2063
    %v2103 = vunpack.c.l.b16 %v2064
    %v2104 = vunpack.c.l.b16 %v2065
    %v2105 = vunpack.c.l.b16 %v2066
    %v2106 = vunpack.c.l.b16 %v2067
    %v2107 = vunpack.c.l.b16 %v2068
    %v2108 = vunpack.c.l.b16 %v2069
    %v2109 = vunpack.c.l.b16 %v2070
    %v2110 = vunpack.c.l.b16 %v2071
    %v2111 = vunpack.c.l.b16 %v2072
    %v2112 = vunpack.c.l.b16 %v2073
    %v2113 = vunpack.c.l.b16 %v2074
    %v2114 = vpack.c.b16 %v2099, %v2098
    %v2115 = vpack.c.b16 %v2101, %v2100
    %v2116 = vpack.c.b16 %v2103, %v2102
    %v2117 = vpack.c.b16 %v2105, %v2104
    %v2118 = vpack.c.b16 %v2107, %v2106
    %v2119 = vpack.c.b16 %v2109, %v2108
    %v2120 = vpack.c.b16 %v2111, %v2110
    %v2121 = vpack.c.b16 %v2113, %v2112
    %2130 = vmatprep.subr.bf16.mxu0 0
    %2131 = vmatpush1.bf16.msra.mxu0 %v2114
    %2132 = vmatprep.subr.bf16.mxu0 0
    %2133 = vmatpush1.bf16.msra.mxu0 %v2115
    %2134 = vmatprep.subr.bf16.mxu0 0
    %2135 = vmatpush1.bf16.msra.mxu0 %v2116
    %2136 = vmatprep.subr.bf16.mxu0 0
    %2137 = vmatpush1.bf16.msra.mxu0 %v2117
    %2138 = vmatprep.subr.bf16.mxu0 0
    %2139 = vmatpush1.bf16.msra.mxu0 %v2118
    %2140 = vmatprep.subr.bf16.mxu0 0
    %2141 = vmatpush1.bf16.msra.mxu0 %v2119
    %2142 = vmatprep.subr.bf16.mxu0 0
    %2143 = vmatpush1.bf16.msra.mxu0 %v2120
    %2144 = vmatprep.subr.bf16.mxu0 0
    %2145 = vmatpush1.bf16.msra.mxu0 %v2121
    %2146 = vmatprep.subr.bf16.mxu0 0
    %2147 = vmatpush1.bf16.msra.mxu0 0
    %2148 = vmatprep.subr.bf16.mxu0 0
    %2149 = vmatpush1.bf16.msra.mxu0 0
    %2150 = vmatprep.subr.bf16.mxu0 0
    %2151 = vmatpush1.bf16.msra.mxu0 0
    %2152 = vmatprep.subr.bf16.mxu0 0
    %2153 = vmatpush1.bf16.msra.mxu0 0
    %2154 = vmatprep.subr.bf16.mxu0 0
    %2155 = vmatpush1.bf16.msra.mxu0 0
    %2156 = vmatprep.subr.bf16.mxu0 0
    %2157 = vmatpush1.bf16.msra.mxu0 0
    %2158 = vmatprep.subr.bf16.mxu0 0
    %2159 = vmatpush1.bf16.msra.mxu0 0
    %2160 = vmatprep.subr.bf16.mxu0 0
    %2161 = vmatpush1.bf16.msra.mxu0 0
    %2162 = vmatprep.mubr.bf16.mxu0 0
    %2163 = vmatmul.mubr.bf16.gmra.mrb[0].mxu0 %v2057
    %v2164 = vpop.f32.mrb[0].mxu0
    %v2165 = vadd.f32 %v2080, %v2164
    %v2166 = vpop.f32.mrb[0].mxu0
    %v2167 = vpop.f32.mrb[0].mxu0
    %v2168 = vadd.f32 %v2080, %v2167
    %v2169 = vpop.f32.mrb[0].mxu0
    %2170 = vmatprep.mubr.bf16.mxu0 0
    %2171 = vmatmul.mubr.bf16.gmra.mrb[0].mxu0 %v2058
    %v2172 = vpop.f32.mrb[0].mxu0
    %v2173 = vadd.f32 %v2080, %v2172
    %v2174 = vpop.f32.mrb[0].mxu0
    %v2175 = vpop.f32.mrb[0].mxu0
    %v2176 = vadd.f32 %v2080, %v2175
    %v2177 = vpop.f32.mrb[0].mxu0
    %2178 = vdwg.mxu0
    %v2179 = vmul.f32 %v2165, %v373
    %v2180 = vmul.f32 %v2168, %v374
    %v2181 = vmul.f32 %v2173, %v375
    %v2182 = vmul.f32 %v2176, %v376
    %v2183 = vmul.f32 %v2165, %v377
    %v2184 = vmul.f32 %v2168, %v378
    %v2185 = vmul.f32 %v2173, %v379
    %v2186 = vmul.f32 %v2176, %v380
    %v2187 = vpack.c.bf16 %v2180, %v2179
    %v2188 = vpack.c.bf16 %v2182, %v2181
    %v2189 = vpack.c.bf16 %v2184, %v2183
    %v2190 = vpack.c.bf16 %v2186, %v2185
    %v2191 = vld [vmem:[#allocation13] sm:$0xf]
    %v2192 = vld [vmem:[#allocation13 + $0x4] sm:$0xf]
    %v2193 = vld [vmem:[#allocation13 + $0x8] sm:$0xf]
    %v2194 = vld [vmem:[#allocation13 + $0xc] sm:$0xf]
    %v2195 = vld [vmem:[#allocation13 + $0x10] sm:$0xf]
    %v2196 = vld [vmem:[#allocation13 + $0x14] sm:$0xf]
    %v2197 = vld [vmem:[#allocation13 + $0x18] sm:$0xf]
    %v2198 = vld [vmem:[#allocation13 + $0x1c] sm:$0xf]
    %v2199 = vld [vmem:[#allocation13 + $0x20] sm:$0xf]
    %v2200 = vld [vmem:[#allocation13 + $0x24] sm:$0xf]
    %v2201 = vld [vmem:[#allocation13 + $0x28] sm:$0xf]
    %v2202 = vld [vmem:[#allocation13 + $0x2c] sm:$0xf]
    %v2203 = vld [vmem:[#allocation13 + $0x30] sm:$0xf]
    %v2204 = vld [vmem:[#allocation13 + $0x34] sm:$0xf]
    %v2205 = vld [vmem:[#allocation13 + $0x38] sm:$0xf]
    %v2206 = vld [vmem:[#allocation13 + $0x3c] sm:$0xf]
    %v2207 = vld [vmem:[%s12] sm:$0x1]
    %v2209 = vlaneseq
    %v2210 = vshrl.u32 %v2209, 7
    %v2211 = vsub.s32 0, %v2210
    %v2212 = vrot.slane %v2207, %v2211
    %v2230 = vunpack.c.l.b16 %v2191
    %v2231 = vunpack.c.l.b16 %v2192
    %v2232 = vunpack.c.l.b16 %v2193
    %v2233 = vunpack.c.l.b16 %v2194
    %v2234 = vunpack.c.l.b16 %v2195
    %v2235 = vunpack.c.l.b16 %v2196
    %v2236 = vunpack.c.l.b16 %v2197
    %v2237 = vunpack.c.l.b16 %v2198
    %v2238 = vunpack.c.l.b16 %v2199
    %v2239 = vunpack.c.l.b16 %v2200
    %v2240 = vunpack.c.l.b16 %v2201
    %v2241 = vunpack.c.l.b16 %v2202
    %v2242 = vunpack.c.l.b16 %v2203
    %v2243 = vunpack.c.l.b16 %v2204
    %v2244 = vunpack.c.l.b16 %v2205
    %v2245 = vunpack.c.l.b16 %v2206
    %v2246 = vpack.c.b16 %v2231, %v2230
    %v2247 = vpack.c.b16 %v2233, %v2232
    %v2248 = vpack.c.b16 %v2235, %v2234
    %v2249 = vpack.c.b16 %v2237, %v2236
    %v2250 = vpack.c.b16 %v2239, %v2238
    %v2251 = vpack.c.b16 %v2241, %v2240
    %v2252 = vpack.c.b16 %v2243, %v2242
    %v2253 = vpack.c.b16 %v2245, %v2244
    %2262 = vmatprep.subr.bf16.mxu0 0
    %2263 = vmatpush1.bf16.msra.mxu0 %v2246
    %2264 = vmatprep.subr.bf16.mxu0 0
    %2265 = vmatpush1.bf16.msra.mxu0 %v2247
    %2266 = vmatprep.subr.bf16.mxu0 0
    %2267 = vmatpush1.bf16.msra.mxu0 %v2248
    %2268 = vmatprep.subr.bf16.mxu0 0
    %2269 = vmatpush1.bf16.msra.mxu0 %v2249
    %2270 = vmatprep.subr.bf16.mxu0 0
    %2271 = vmatpush1.bf16.msra.mxu0 %v2250
    %2272 = vmatprep.subr.bf16.mxu0 0
    %2273 = vmatpush1.bf16.msra.mxu0 %v2251
    %2274 = vmatprep.subr.bf16.mxu0 0
    %2275 = vmatpush1.bf16.msra.mxu0 %v2252
    %2276 = vmatprep.subr.bf16.mxu0 0
    %2277 = vmatpush1.bf16.msra.mxu0 %v2253
    %2278 = vmatprep.subr.bf16.mxu0 0
    %2279 = vmatpush1.bf16.msra.mxu0 0
    %2280 = vmatprep.subr.bf16.mxu0 0
    %2281 = vmatpush1.bf16.msra.mxu0 0
    %2282 = vmatprep.subr.bf16.mxu0 0
    %2283 = vmatpush1.bf16.msra.mxu0 0
    %2284 = vmatprep.subr.bf16.mxu0 0
    %2285 = vmatpush1.bf16.msra.mxu0 0
    %2286 = vmatprep.subr.bf16.mxu0 0
    %2287 = vmatpush1.bf16.msra.mxu0 0
    %2288 = vmatprep.subr.bf16.mxu0 0
    %2289 = vmatpush1.bf16.msra.mxu0 0
    %2290 = vmatprep.subr.bf16.mxu0 0
    %2291 = vmatpush1.bf16.msra.mxu0 0
    %2292 = vmatprep.subr.bf16.mxu0 0
    %2293 = vmatpush1.bf16.msra.mxu0 0
    %2294 = vmatprep.mubr.bf16.mxu0 0
    %2295 = vmatmul.mubr.bf16.gmra.mrb[0].mxu0 %v2187
    %v2296 = vpop.f32.mrb[0].mxu0
    %v2297 = vadd.f32 %v2212, %v2296
    %v2298 = vpop.f32.mrb[0].mxu0
    %v2299 = vpop.f32.mrb[0].mxu0
    %v2300 = vadd.f32 %v2212, %v2299
    %v2301 = vpop.f32.mrb[0].mxu0
    %2302 = vmatprep.mubr.bf16.mxu0 0
    %2303 = vmatmul.mubr.bf16.gmra.mrb[0].mxu0 %v2188
    %v2304 = vpop.f32.mrb[0].mxu0
    %v2305 = vadd.f32 %v2212, %v2304
    %v2306 = vpop.f32.mrb[0].mxu0
    %v2307 = vpop.f32.mrb[0].mxu0
    %v2308 = vadd.f32 %v2212, %v2307
    %v2309 = vpop.f32.mrb[0].mxu0
    %2310 = vmatprep.mubr.bf16.mxu0 0
    %2311 = vmatmul.mubr.bf16.gmra.mrb[0].mxu0 %v2189
    %v2312 = vpop.f32.mrb[0].mxu0
    %v2313 = vadd.f32 %v2212, %v2312
    %v2314 = vpop.f32.mrb[0].mxu0
    %v2315 = vpop.f32.mrb[0].mxu0
    %v2316 = vadd.f32 %v2212, %v2315
    %v2317 = vpop.f32.mrb[0].mxu0
    %2318 = vmatprep.mubr.bf16.mxu0 0
    %2319 = vmatmul.mubr.bf16.gmra.mrb[0].mxu0 %v2190
    %v2320 = vpop.f32.mrb[0].mxu0
    %v2321 = vadd.f32 %v2212, %v2320
    %v2322 = vpop.f32.mrb[0].mxu0
    %v2323 = vpop.f32.mrb[0].mxu0
    %v2324 = vadd.f32 %v2212, %v2323
    %v2325 = vpop.f32.mrb[0].mxu0
    %2326 = vdwg.mxu0
    %2327 = vst [vmem:[#allocation14] sm:$0xff] %v2297
    %2328 = vst [vmem:[#allocation14 + $0x8] sm:$0xff] %v2300
    %2329 = vst [vmem:[#allocation14 + $0x10] sm:$0xff] %v2305
    %2330 = vst [vmem:[#allocation14 + $0x18] sm:$0xff] %v2308
    %2331 = vst [vmem:[#allocation14 + $0x20] sm:$0xff] %v2313
    %2332 = vst [vmem:[#allocation14 + $0x28] sm:$0xff] %v2316
    %2333 = vst [vmem:[#allocation14 + $0x30] sm:$0xff] %v2321
    %2334 = vst [vmem:[#allocation14 + $0x38] sm:$0xff] %v2324
    // Predicated region
    $region82: #{tpu_custom_call.1} parent=1 // pred_check
      _
    $region83: #{tpu_custom_call.1} parent=1 // pred_check_branch
      %2336 = sbr.rel (0) target = $region85
    $region84: #{tpu_custom_call.1} parent=1 // pred_region
      %s2338 = ssub.s32 1024, 1024
      %2339 = vsyncadd [#allocation4], %s2338
      %s2340 = sshll.u32 [#allocation14], 4
      %s2341 = int_to_ptr.vmem [resolvable:$true] %s2340
      %2346 = dma.vmem_to_hbm [thread:$0]  %s2341, 1024, %s13, [#allocation4], 128, 128, 8
    $region85: #{tpu_custom_call.1} parent=1 // pred_fallthru
      _
    // Predicated region
    $region86: #{tpu_custom_call.1} parent=1 // pred_check
      _
    $region87: #{tpu_custom_call.1} parent=1 // pred_check_branch
      %2348 = sbr.rel (0) target = $region89
    $region88: #{tpu_custom_call.1} parent=1 // pred_region
      %2349 = dma.done [#allocation4], 1024
    $region89: #{tpu_custom_call.1} parent=1 // pred_fallthru
      _
    %2350 = vsyncpa [#allocation3], 1
    %2351 = vsyncpa [#allocation6], 1
    %2352 = vsyncpa [#allocation9], 1
    %2353 = vsyncpa [#allocation12], 1
    %2354 = vsyncpa [#allocation4], 1

</llo_original>
